<compile_context>
chip_gen: v6e
topology: v6e:2x2x1
jax: 0.10.0
libtpu: 0.0.40
codegen_flags: <defaults>
</compile_context>

<pallas_src>
import functools
import math

import jax
import jax.numpy as jnp
import numpy as np
from jax import lax
from jax.experimental import pallas as pl
from jax.experimental.pallas import tpu as pltpu

LN_EPS = 1e-5


def _layernorm_f32(v, g, b):
    mu = jnp.mean(v, axis=-1, keepdims=True)
    var = jnp.mean((v - mu) ** 2, axis=-1, keepdims=True)
    return (v - mu) * lax.rsqrt(var + LN_EPS) * g + b


def _gelu_exact(x):
    # matches torch.nn.functional.gelu default (erf based), computed in f32
    return 0.5 * x * (1.0 + lax.erf(x * (1.0 / math.sqrt(2.0))))


def encoder_layer_kernel(
    x_ref,                        # (1, S, D)
    ln1_g_ref, ln1_b_ref,         # (1, D)  f32
    wqkv_ref,                     # (D, 3D) bf16   (qkv_bias=False)
    wproj_ref, bproj_ref,         # (H, hd, D) bf16, (1, D) f32
    ln2_g_ref, ln2_b_ref,         # (1, D)  f32
    w1_ref, b1_ref,               # (D, F) bf16, (1, F) f32
    w2_ref, b2_ref,               # (F, D) bf16, (1, D) f32
    o_ref,                        # (1, S, D)
    *, num_heads,
):
    x = x_ref[0].astype(jnp.float32)           # (S, D)
    S, D = x.shape
    hd = D // num_heads
    scale = hd ** -0.5

    # Hoist small parameters once (f32 for VPU math; weights stay bf16).
    ln1_g = ln1_g_ref[...]
    ln1_b = ln1_b_ref[...]
    ln2_g = ln2_g_ref[...]
    ln2_b = ln2_b_ref[...]
    bproj = bproj_ref[...]
    b1 = b1_ref[...]
    b2 = b2_ref[...]
    wqkv = wqkv_ref[...]          # bf16 (D, 3D)
    w1 = w1_ref[...]              # bf16 (D, F)
    w2 = w2_ref[...]              # bf16 (F, D)

    # ---- Multi-head self attention block (pre-norm) ----
    residual = x
    xn = _layernorm_f32(x, ln1_g, ln1_b)

    qkv = jnp.dot(xn.astype(jnp.bfloat16), wqkv,
                  preferred_element_type=jnp.float32)        # (S, 3D) f32
    q = qkv[:, 0 * D:1 * D].astype(jnp.bfloat16)
    k = qkv[:, 1 * D:2 * D].astype(jnp.bfloat16)
    v = qkv[:, 2 * D:3 * D].astype(jnp.bfloat16)

    attn_acc = jnp.zeros((S, D), jnp.float32)                # folded proj accumulator
    for h in range(num_heads):                               # static unroll over heads
        qh = q[:, h * hd:(h + 1) * hd]                       # (S, hd) bf16
        kh = k[:, h * hd:(h + 1) * hd]
        vh = v[:, h * hd:(h + 1) * hd]
        # q @ k^T without materializing a transpose (contract dim 1 of both).
        s = lax.dot_general(qh, kh, (((1,), (1,)), ((), ())),
                            preferred_element_type=jnp.float32) * scale
        s = s - jnp.max(s, axis=-1, keepdims=True)
        p = jnp.exp(s)
        inv = pl.reciprocal(jnp.sum(p, axis=-1, keepdims=True), approx=True)
        p = (p * inv).astype(jnp.bfloat16)
        head_out = jnp.dot(p, vh, preferred_element_type=jnp.float32)   # (S, hd)
        # Fold the output projection: accumulate this head's contribution.
        attn_acc = attn_acc + jnp.dot(head_out.astype(jnp.bfloat16),
                                      wproj_ref[h],
                                      preferred_element_type=jnp.float32)
    x = residual + attn_acc + bproj
    # (attn dropout / proj dropout / drop_path are identity in eval mode)

    # ---- FFN block (pre-norm) ----
    residual = x
    xn = _layernorm_f32(x, ln2_g, ln2_b)
    h1 = jnp.dot(xn.astype(jnp.bfloat16), w1,
                 preferred_element_type=jnp.float32) + b1
    h1 = _gelu_exact(h1)
    h2 = jnp.dot(h1.astype(jnp.bfloat16), w2,
                 preferred_element_type=jnp.float32) + b2
    x = residual + h2

    o_ref[0] = x.astype(o_ref.dtype)


def transformer_encoder_layer(x, params, num_heads):
    """x: (B, S, D) float32.  params: dict of weights (see init_params)."""
    B, S, D = x.shape
    F = params["w1"].shape[1]
    hd = D // num_heads

    # Pre-reshape the projection weight so each head slice is a clean
    # leading-axis tile inside the kernel.
    wproj_h = params["wproj"].reshape(num_heads, hd, D)

    def full(shape):
        nd = len(shape)
        return pl.BlockSpec(shape, lambda b, _nd=nd: (0,) * _nd)

    kernel = functools.partial(encoder_layer_kernel, num_heads=num_heads)

    # Explicit VMEM budget: double-buffered weights + activation blocks + headroom.
    bf16, f32 = 2, 4
    weight_bytes = (D * 3 * D + D * D + D * F + F * D) * bf16
    small_bytes = (6 * D + F) * f32
    act_bytes = 2 * S * D * x.dtype.itemsize
    vmem_limit = int(min(128 * 1024 * 1024,
                         2 * (weight_bytes + small_bytes + act_bytes) + (16 << 20)))

    return pl.pallas_call(
        kernel,
        out_shape=jax.ShapeDtypeStruct((B, S, D), x.dtype),
        grid=(B,),
        in_specs=[
            pl.BlockSpec((1, S, D), lambda b: (b, 0, 0)),   # x
            full((1, D)), full((1, D)),                     # ln1 gamma/beta
            full((D, 3 * D)),                               # wqkv (bf16)
            full((num_heads, hd, D)), full((1, D)),         # proj w (bf16) / b
            full((1, D)), full((1, D)),                     # ln2 gamma/beta
            full((D, F)), full((1, F)),                     # fc1 w (bf16) / b
            full((F, D)), full((1, D)),                     # fc2 w (bf16) / b
        ],
        out_specs=pl.BlockSpec((1, S, D), lambda b: (b, 0, 0)),
        compiler_params=pltpu.CompilerParams(
            dimension_semantics=("parallel",),
            vmem_limit_bytes=vmem_limit),
    )(
        x,
        params["ln1_g"], params["ln1_b"],
        params["wqkv"],
        wproj_h, params["bproj"],
        params["ln2_g"], params["ln2_b"],
        params["w1"], params["b1"],
        params["w2"], params["b2"],
    )


def init_params(key, dim, num_heads, mlp_ratio=4.0):
    ffn = int(mlp_ratio * dim)
    ks = jax.random.split(key, 8)
    std = 0.02

    def w(k, shape):
        # weights live in bf16 in HBM (halves DMA + VMEM footprint)
        return (std * jax.random.normal(k, shape, jnp.float32)).astype(jnp.bfloat16)

    return {
        "ln1_g": jnp.ones((1, dim), jnp.float32),
        "ln1_b": jnp.zeros((1, dim), jnp.float32),
        "wqkv": w(ks[0], (dim, 3 * dim)),
        "wproj": w(ks[1], (dim, dim)),
        "bproj": std * jax.random.normal(ks[2], (1, dim), jnp.float32),
        "ln2_g": jnp.ones((1, dim), jnp.float32),
        "ln2_b": jnp.zeros((1, dim), jnp.float32),
        "w1": w(ks[3], (dim, ffn)),
        "b1": std * jax.random.normal(ks[4], (1, ffn), jnp.float32),
        "w2": w(ks[5], (ffn, dim)),
        "b2": std * jax.random.normal(ks[6], (1, dim), jnp.float32),
    }


def reference_forward(x, p, num_heads):
    """Pure-JAX f32 reference mirroring the PyTorch forward (eval mode)."""
    B, S, D = x.shape
    hd = D // num_heads
    scale = hd ** -0.5

    def ln(v, g, b):
        mu = v.mean(-1, keepdims=True)
        var = ((v - mu) ** 2).mean(-1, keepdims=True)
        return (v - mu) / jnp.sqrt(var + LN_EPS) * g + b

    wqkv = p["wqkv"].astype(jnp.float32)
    wproj = p["wproj"].astype(jnp.float32)
    w1 = p["w1"].astype(jnp.float32)
    w2 = p["w2"].astype(jnp.float32)

    residual = x
    xn = ln(x, p["ln1_g"], p["ln1_b"])
    qkv = xn @ wqkv                                          # (B,S,3D)
    q, k, v = jnp.split(qkv, 3, axis=-1)
    q = q.reshape(B, S, num_heads, hd).transpose(0, 2, 1, 3)
    k = k.reshape(B, S, num_heads, hd).transpose(0, 2, 1, 3)
    v = v.reshape(B, S, num_heads, hd).transpose(0, 2, 1, 3)
    att = jnp.einsum("bhqd,bhkd->bhqk", q, k) * scale
    att = jax.nn.softmax(att, axis=-1)
    o = jnp.einsum("bhqk,bhkd->bhqd", att, v).transpose(0, 2, 1, 3).reshape(B, S, D)
    o = o @ wproj + p["bproj"]
    x = residual + o

    residual = x
    xn = ln(x, p["ln2_g"], p["ln2_b"])
    h1 = xn @ w1 + p["b1"]
    h1 = 0.5 * h1 * (1.0 + lax.erf(h1 / jnp.sqrt(2.0)))
    h2 = h1 @ w2 + p["b2"]
    return residual + h2


if __name__ == "__main__":
    B, S, D, H = 2, 8, 32, 4          # batch, patch_num, embed_dim, num_heads
    key = jax.random.PRNGKey(0)
    kx, kp = jax.random.split(key)
    x = jax.random.normal(kx, (B, S, D), jnp.float32)
    params = init_params(kp, D, H, mlp_ratio=4.0)

    out = transformer_encoder_layer(x, params, num_heads=H)
    out = jax.block_until_ready(out)

    ref = jax.block_until_ready(reference_forward(x, params, H))
    np.testing.assert_allclose(np.asarray(out), np.asarray(ref),
                               rtol=2e-2, atol=2e-2)
    assert out.shape == (B, S, D)
    print("KERNEL_OK")
</pallas_src>

<mosaic_0001>
module attributes {stable_mosaic.version = 11 : i64} {
  func.func @encoder_layer_kernel(%arg0: i32, %arg1: memref<1x8x32xf32, #tpu.memory_space<vmem>>, %arg2: memref<1x32xf32, #tpu.memory_space<vmem>>, %arg3: memref<1x32xf32, #tpu.memory_space<vmem>>, %arg4: memref<32x96xbf16, #tpu.memory_space<vmem>>, %arg5: memref<4x8x32xbf16, #tpu.memory_space<vmem>>, %arg6: memref<1x32xf32, #tpu.memory_space<vmem>>, %arg7: memref<1x32xf32, #tpu.memory_space<vmem>>, %arg8: memref<1x32xf32, #tpu.memory_space<vmem>>, %arg9: memref<32x128xbf16, #tpu.memory_space<vmem>>, %arg10: memref<1x128xf32, #tpu.memory_space<vmem>>, %arg11: memref<128x32xbf16, #tpu.memory_space<vmem>>, %arg12: memref<1x32xf32, #tpu.memory_space<vmem>>, %arg13: memref<1x8x32xf32, #tpu.memory_space<vmem>>) attributes {dimension_semantics = [#tpu.dimension_semantics<parallel>], iteration_bounds = array<i64: 2>, scalar_prefetch = 0 : i64, scratch_operands = 0 : i64, tpu.core_type = #tpu.core_type<tc>, window_params = [{transform_indices = @transform_0, window_bounds = array<i64: 1, 8, 32>}, {pipeline_mode = #tpu.pipeline_mode<synchronous>, transform_indices = @transform_1, window_bounds = array<i64: 1, 32>}, {pipeline_mode = #tpu.pipeline_mode<synchronous>, transform_indices = @transform_2, window_bounds = array<i64: 1, 32>}, {pipeline_mode = #tpu.pipeline_mode<synchronous>, transform_indices = @transform_3, window_bounds = array<i64: 32, 96>}, {pipeline_mode = #tpu.pipeline_mode<synchronous>, transform_indices = @transform_4, window_bounds = array<i64: 4, 8, 32>}, {pipeline_mode = #tpu.pipeline_mode<synchronous>, transform_indices = @transform_5, window_bounds = array<i64: 1, 32>}, {pipeline_mode = #tpu.pipeline_mode<synchronous>, transform_indices = @transform_6, window_bounds = array<i64: 1, 32>}, {pipeline_mode = #tpu.pipeline_mode<synchronous>, transform_indices = @transform_7, window_bounds = array<i64: 1, 32>}, {pipeline_mode = #tpu.pipeline_mode<synchronous>, transform_indices = @transform_8, window_bounds = array<i64: 32, 128>}, {pipeline_mode = #tpu.pipeline_mode<synchronous>, transform_indices = @transform_9, window_bounds = array<i64: 1, 128>}, {pipeline_mode = #tpu.pipeline_mode<synchronous>, transform_indices = @transform_10, window_bounds = array<i64: 128, 32>}, {pipeline_mode = #tpu.pipeline_mode<synchronous>, transform_indices = @transform_11, window_bounds = array<i64: 1, 32>}, {transform_indices = @transform_12, window_bounds = array<i64: 1, 8, 32>}]} {
    %c0 = arith.constant 0 : index
    %c0_0 = arith.constant 0 : index
    %c0_1 = arith.constant 0 : index
    %0 = vector.load %arg1[%c0, %c0_0, %c0_1] : memref<1x8x32xf32, #tpu.memory_space<vmem>>, vector<1x8x32xf32>
    %1 = vector.shape_cast %0 : vector<1x8x32xf32> to vector<8x32xf32>
    %c0_2 = arith.constant 0 : index
    %c0_3 = arith.constant 0 : index
    %2 = vector.load %arg2[%c0_2, %c0_3] : memref<1x32xf32, #tpu.memory_space<vmem>>, vector<1x32xf32>
    %c0_4 = arith.constant 0 : index
    %c0_5 = arith.constant 0 : index
    %3 = vector.load %arg3[%c0_4, %c0_5] : memref<1x32xf32, #tpu.memory_space<vmem>>, vector<1x32xf32>
    %c0_6 = arith.constant 0 : index
    %c0_7 = arith.constant 0 : index
    %4 = vector.load %arg7[%c0_6, %c0_7] : memref<1x32xf32, #tpu.memory_space<vmem>>, vector<1x32xf32>
    %c0_8 = arith.constant 0 : index
    %c0_9 = arith.constant 0 : index
    %5 = vector.load %arg8[%c0_8, %c0_9] : memref<1x32xf32, #tpu.memory_space<vmem>>, vector<1x32xf32>
    %c0_10 = arith.constant 0 : index
    %c0_11 = arith.constant 0 : index
    %6 = vector.load %arg6[%c0_10, %c0_11] : memref<1x32xf32, #tpu.memory_space<vmem>>, vector<1x32xf32>
    %c0_12 = arith.constant 0 : index
    %c0_13 = arith.constant 0 : index
    %7 = vector.load %arg10[%c0_12, %c0_13] : memref<1x128xf32, #tpu.memory_space<vmem>>, vector<1x128xf32>
    %c0_14 = arith.constant 0 : index
    %c0_15 = arith.constant 0 : index
    %8 = vector.load %arg12[%c0_14, %c0_15] : memref<1x32xf32, #tpu.memory_space<vmem>>, vector<1x32xf32>
    %c0_16 = arith.constant 0 : index
    %c0_17 = arith.constant 0 : index
    %9 = vector.load %arg4[%c0_16, %c0_17] : memref<32x96xbf16, #tpu.memory_space<vmem>>, vector<32x96xbf16>
    %c0_18 = arith.constant 0 : index
    %c0_19 = arith.constant 0 : index
    %10 = vector.load %arg9[%c0_18, %c0_19] : memref<32x128xbf16, #tpu.memory_space<vmem>>, vector<32x128xbf16>
    %c0_20 = arith.constant 0 : index
    %c0_21 = arith.constant 0 : index
    %11 = vector.load %arg11[%c0_20, %c0_21] : memref<128x32xbf16, #tpu.memory_space<vmem>>, vector<128x32xbf16>
    %cst = arith.constant dense<0.000000e+00> : vector<8xf32>
    %12 = vector.multi_reduction <add>, %1, %cst [1] : vector<8x32xf32> to vector<8xf32>
    %13 = vector.shape_cast %12 : vector<8xf32> to vector<8x1xf32>
    %cst_22 = arith.constant 3.200000e+01 : f32
    %14 = vector.broadcast %cst_22 : f32 to vector<8x1xf32>
    %15 = arith.divf %13, %14 : vector<8x1xf32>
    %16 = vector.broadcast %15 : vector<8x1xf32> to vector<8x32xf32>
    %17 = arith.subf %1, %16 : vector<8x32xf32>
    %18 = arith.mulf %17, %17 : vector<8x32xf32>
    %cst_23 = arith.constant dense<0.000000e+00> : vector<8xf32>
    %19 = vector.multi_reduction <add>, %18, %cst_23 [1] : vector<8x32xf32> to vector<8xf32>
    %20 = vector.shape_cast %19 : vector<8xf32> to vector<8x1xf32>
    %cst_24 = arith.constant 3.200000e+01 : f32
    %21 = vector.broadcast %cst_24 : f32 to vector<8x1xf32>
    %22 = arith.divf %20, %21 : vector<8x1xf32>
    %23 = vector.broadcast %15 : vector<8x1xf32> to vector<8x32xf32>
    %24 = arith.subf %1, %23 : vector<8x32xf32>
    %cst_25 = arith.constant 9.99999974E-6 : f32
    %25 = vector.broadcast %cst_25 : f32 to vector<8x1xf32>
    %26 = arith.addf %22, %25 : vector<8x1xf32>
    %27 = math.rsqrt %26 : vector<8x1xf32>
    %28 = vector.broadcast %27 : vector<8x1xf32> to vector<8x32xf32>
    %29 = arith.mulf %24, %28 : vector<8x32xf32>
    %30 = vector.broadcast %2 : vector<1x32xf32> to vector<8x32xf32>
    %31 = arith.mulf %29, %30 : vector<8x32xf32>
    %32 = vector.broadcast %3 : vector<1x32xf32> to vector<8x32xf32>
    %33 = arith.addf %31, %32 : vector<8x32xf32>
    %34 = arith.truncf %33 : vector<8x32xf32> to vector<8x32xbf16>
    %cst_26 = arith.constant dense<0.000000e+00> : vector<8x96xf32>
    %35 = tpu.matmul %34, %9, %cst_26 {dimension_numbers = #tpu.dot_dimension_numbers<[1], [0], [0], [1], [0, 0, 1, 1], [], []>} : vector<8x32xbf16>, vector<32x96xbf16>, vector<8x96xf32> -> vector<8x96xf32>
    %36 = vector.extract_strided_slice %35 {offsets = [0, 0], sizes = [8, 32], strides = [1, 1]} : vector<8x96xf32> to vector<8x32xf32>
    %37 = arith.truncf %36 : vector<8x32xf32> to vector<8x32xbf16>
    %38 = vector.extract_strided_slice %35 {offsets = [0, 32], sizes = [8, 32], strides = [1, 1]} : vector<8x96xf32> to vector<8x32xf32>
    %39 = arith.truncf %38 : vector<8x32xf32> to vector<8x32xbf16>
    %40 = vector.extract_strided_slice %35 {offsets = [0, 64], sizes = [8, 32], strides = [1, 1]} : vector<8x96xf32> to vector<8x32xf32>
    %41 = arith.truncf %40 : vector<8x32xf32> to vector<8x32xbf16>
    %cst_27 = arith.constant 0.000000e+00 : f32
    %42 = vector.broadcast %cst_27 : f32 to vector<8x32xf32>
    %43 = vector.extract_strided_slice %37 {offsets = [0, 0], sizes = [8, 8], strides = [1, 1]} : vector<8x32xbf16> to vector<8x8xbf16>
    %44 = vector.extract_strided_slice %39 {offsets = [0, 0], sizes = [8, 8], strides = [1, 1]} : vector<8x32xbf16> to vector<8x8xbf16>
    %45 = vector.extract_strided_slice %41 {offsets = [0, 0], sizes = [8, 8], strides = [1, 1]} : vector<8x32xbf16> to vector<8x8xbf16>
    %cst_28 = arith.constant dense<0.000000e+00> : vector<8x8xf32>
    %46 = tpu.matmul %43, %44, %cst_28 {dimension_numbers = #tpu.dot_dimension_numbers<[1], [1], [0], [0], [0, 0, 1, 0], [], []>} : vector<8x8xbf16>, vector<8x8xbf16>, vector<8x8xf32> -> vector<8x8xf32>
    %cst_29 = arith.constant 0.353553385 : f32
    %47 = vector.broadcast %cst_29 : f32 to vector<8x8xf32>
    %48 = arith.mulf %46, %47 : vector<8x8xf32>
    %cst_30 = arith.constant dense<0xFF800000> : vector<8xf32>
    %49 = vector.multi_reduction <maximumf>, %48, %cst_30 [1] : vector<8x8xf32> to vector<8xf32>
    %50 = vector.shape_cast %49 : vector<8xf32> to vector<8x1xf32>
    %51 = vector.broadcast %50 : vector<8x1xf32> to vector<8x8xf32>
    %52 = arith.subf %48, %51 : vector<8x8xf32>
    %53 = math.exp %52 : vector<8x8xf32>
    %cst_31 = arith.constant dense<0.000000e+00> : vector<8xf32>
    %54 = vector.multi_reduction <add>, %53, %cst_31 [1] : vector<8x8xf32> to vector<8xf32>
    %55 = vector.shape_cast %54 : vector<8xf32> to vector<8x1xf32>
    %56 = tpu.reciprocal %55 {approx = true} : vector<8x1xf32> -> vector<8x1xf32>
    %57 = vector.broadcast %56 : vector<8x1xf32> to vector<8x8xf32>
    %58 = arith.mulf %53, %57 : vector<8x8xf32>
    %59 = arith.truncf %58 : vector<8x8xf32> to vector<8x8xbf16>
    %cst_32 = arith.constant dense<0.000000e+00> : vector<8x8xf32>
    %60 = tpu.matmul %59, %45, %cst_32 {dimension_numbers = #tpu.dot_dimension_numbers<[1], [0], [0], [1], [0, 0, 1, 1], [], []>} : vector<8x8xbf16>, vector<8x8xbf16>, vector<8x8xf32> -> vector<8x8xf32>
    %61 = arith.truncf %60 : vector<8x8xf32> to vector<8x8xbf16>
    %c0_33 = arith.constant 0 : index
    %c0_34 = arith.constant 0 : index
    %c0_35 = arith.constant 0 : index
    %62 = vector.load %arg5[%c0_33, %c0_34, %c0_35] : memref<4x8x32xbf16, #tpu.memory_space<vmem>>, vector<1x8x32xbf16>
    %63 = vector.shape_cast %62 : vector<1x8x32xbf16> to vector<8x32xbf16>
    %cst_36 = arith.constant dense<0.000000e+00> : vector<8x32xf32>
    %64 = tpu.matmul %61, %63, %cst_36 {dimension_numbers = #tpu.dot_dimension_numbers<[1], [0], [0], [1], [0, 0, 1, 1], [], []>} : vector<8x8xbf16>, vector<8x32xbf16>, vector<8x32xf32> -> vector<8x32xf32>
    %65 = arith.addf %42, %64 : vector<8x32xf32>
    %66 = vector.extract_strided_slice %37 {offsets = [0, 8], sizes = [8, 8], strides = [1, 1]} : vector<8x32xbf16> to vector<8x8xbf16>
    %67 = vector.extract_strided_slice %39 {offsets = [0, 8], sizes = [8, 8], strides = [1, 1]} : vector<8x32xbf16> to vector<8x8xbf16>
    %68 = vector.extract_strided_slice %41 {offsets = [0, 8], sizes = [8, 8], strides = [1, 1]} : vector<8x32xbf16> to vector<8x8xbf16>
    %cst_37 = arith.constant dense<0.000000e+00> : vector<8x8xf32>
    %69 = tpu.matmul %66, %67, %cst_37 {dimension_numbers = #tpu.dot_dimension_numbers<[1], [1], [0], [0], [0, 0, 1, 0], [], []>} : vector<8x8xbf16>, vector<8x8xbf16>, vector<8x8xf32> -> vector<8x8xf32>
    %cst_38 = arith.constant 0.353553385 : f32
    %70 = vector.broadcast %cst_38 : f32 to vector<8x8xf32>
    %71 = arith.mulf %69, %70 : vector<8x8xf32>
    %cst_39 = arith.constant dense<0xFF800000> : vector<8xf32>
    %72 = vector.multi_reduction <maximumf>, %71, %cst_39 [1] : vector<8x8xf32> to vector<8xf32>
    %73 = vector.shape_cast %72 : vector<8xf32> to vector<8x1xf32>
    %74 = vector.broadcast %73 : vector<8x1xf32> to vector<8x8xf32>
    %75 = arith.subf %71, %74 : vector<8x8xf32>
    %76 = math.exp %75 : vector<8x8xf32>
    %cst_40 = arith.constant dense<0.000000e+00> : vector<8xf32>
    %77 = vector.multi_reduction <add>, %76, %cst_40 [1] : vector<8x8xf32> to vector<8xf32>
    %78 = vector.shape_cast %77 : vector<8xf32> to vector<8x1xf32>
    %79 = tpu.reciprocal %78 {approx = true} : vector<8x1xf32> -> vector<8x1xf32>
    %80 = vector.broadcast %79 : vector<8x1xf32> to vector<8x8xf32>
    %81 = arith.mulf %76, %80 : vector<8x8xf32>
    %82 = arith.truncf %81 : vector<8x8xf32> to vector<8x8xbf16>
    %cst_41 = arith.constant dense<0.000000e+00> : vector<8x8xf32>
    %83 = tpu.matmul %82, %68, %cst_41 {dimension_numbers = #tpu.dot_dimension_numbers<[1], [0], [0], [1], [0, 0, 1, 1], [], []>} : vector<8x8xbf16>, vector<8x8xbf16>, vector<8x8xf32> -> vector<8x8xf32>
    %84 = arith.truncf %83 : vector<8x8xf32> to vector<8x8xbf16>
    %c1 = arith.constant 1 : index
    %c0_42 = arith.constant 0 : index
    %c0_43 = arith.constant 0 : index
    %85 = vector.load %arg5[%c1, %c0_42, %c0_43] : memref<4x8x32xbf16, #tpu.memory_space<vmem>>, vector<1x8x32xbf16>
    %86 = vector.shape_cast %85 : vector<1x8x32xbf16> to vector<8x32xbf16>
    %cst_44 = arith.constant dense<0.000000e+00> : vector<8x32xf32>
    %87 = tpu.matmul %84, %86, %cst_44 {dimension_numbers = #tpu.dot_dimension_numbers<[1], [0], [0], [1], [0, 0, 1, 1], [], []>} : vector<8x8xbf16>, vector<8x32xbf16>, vector<8x32xf32> -> vector<8x32xf32>
    %88 = arith.addf %65, %87 : vector<8x32xf32>
    %89 = vector.extract_strided_slice %37 {offsets = [0, 16], sizes = [8, 8], strides = [1, 1]} : vector<8x32xbf16> to vector<8x8xbf16>
    %90 = vector.extract_strided_slice %39 {offsets = [0, 16], sizes = [8, 8], strides = [1, 1]} : vector<8x32xbf16> to vector<8x8xbf16>
    %91 = vector.extract_strided_slice %41 {offsets = [0, 16], sizes = [8, 8], strides = [1, 1]} : vector<8x32xbf16> to vector<8x8xbf16>
    %cst_45 = arith.constant dense<0.000000e+00> : vector<8x8xf32>
    %92 = tpu.matmul %89, %90, %cst_45 {dimension_numbers = #tpu.dot_dimension_numbers<[1], [1], [0], [0], [0, 0, 1, 0], [], []>} : vector<8x8xbf16>, vector<8x8xbf16>, vector<8x8xf32> -> vector<8x8xf32>
    %cst_46 = arith.constant 0.353553385 : f32
    %93 = vector.broadcast %cst_46 : f32 to vector<8x8xf32>
    %94 = arith.mulf %92, %93 : vector<8x8xf32>
    %cst_47 = arith.constant dense<0xFF800000> : vector<8xf32>
    %95 = vector.multi_reduction <maximumf>, %94, %cst_47 [1] : vector<8x8xf32> to vector<8xf32>
    %96 = vector.shape_cast %95 : vector<8xf32> to vector<8x1xf32>
    %97 = vector.broadcast %96 : vector<8x1xf32> to vector<8x8xf32>
    %98 = arith.subf %94, %97 : vector<8x8xf32>
    %99 = math.exp %98 : vector<8x8xf32>
    %cst_48 = arith.constant dense<0.000000e+00> : vector<8xf32>
    %100 = vector.multi_reduction <add>, %99, %cst_48 [1] : vector<8x8xf32> to vector<8xf32>
    %101 = vector.shape_cast %100 : vector<8xf32> to vector<8x1xf32>
    %102 = tpu.reciprocal %101 {approx = true} : vector<8x1xf32> -> vector<8x1xf32>
    %103 = vector.broadcast %102 : vector<8x1xf32> to vector<8x8xf32>
    %104 = arith.mulf %99, %103 : vector<8x8xf32>
    %105 = arith.truncf %104 : vector<8x8xf32> to vector<8x8xbf16>
    %cst_49 = arith.constant dense<0.000000e+00> : vector<8x8xf32>
    %106 = tpu.matmul %105, %91, %cst_49 {dimension_numbers = #tpu.dot_dimension_numbers<[1], [0], [0], [1], [0, 0, 1, 1], [], []>} : vector<8x8xbf16>, vector<8x8xbf16>, vector<8x8xf32> -> vector<8x8xf32>
    %107 = arith.truncf %106 : vector<8x8xf32> to vector<8x8xbf16>
    %c2 = arith.constant 2 : index
    %c0_50 = arith.constant 0 : index
    %c0_51 = arith.constant 0 : index
    %108 = vector.load %arg5[%c2, %c0_50, %c0_51] : memref<4x8x32xbf16, #tpu.memory_space<vmem>>, vector<1x8x32xbf16>
    %109 = vector.shape_cast %108 : vector<1x8x32xbf16> to vector<8x32xbf16>
    %cst_52 = arith.constant dense<0.000000e+00> : vector<8x32xf32>
    %110 = tpu.matmul %107, %109, %cst_52 {dimension_numbers = #tpu.dot_dimension_numbers<[1], [0], [0], [1], [0, 0, 1, 1], [], []>} : vector<8x8xbf16>, vector<8x32xbf16>, vector<8x32xf32> -> vector<8x32xf32>
    %111 = arith.addf %88, %110 : vector<8x32xf32>
    %112 = vector.extract_strided_slice %37 {offsets = [0, 24], sizes = [8, 8], strides = [1, 1]} : vector<8x32xbf16> to vector<8x8xbf16>
    %113 = vector.extract_strided_slice %39 {offsets = [0, 24], sizes = [8, 8], strides = [1, 1]} : vector<8x32xbf16> to vector<8x8xbf16>
    %114 = vector.extract_strided_slice %41 {offsets = [0, 24], sizes = [8, 8], strides = [1, 1]} : vector<8x32xbf16> to vector<8x8xbf16>
    %cst_53 = arith.constant dense<0.000000e+00> : vector<8x8xf32>
    %115 = tpu.matmul %112, %113, %cst_53 {dimension_numbers = #tpu.dot_dimension_numbers<[1], [1], [0], [0], [0, 0, 1, 0], [], []>} : vector<8x8xbf16>, vector<8x8xbf16>, vector<8x8xf32> -> vector<8x8xf32>
    %cst_54 = arith.constant 0.353553385 : f32
    %116 = vector.broadcast %cst_54 : f32 to vector<8x8xf32>
    %117 = arith.mulf %115, %116 : vector<8x8xf32>
    %cst_55 = arith.constant dense<0xFF800000> : vector<8xf32>
    %118 = vector.multi_reduction <maximumf>, %117, %cst_55 [1] : vector<8x8xf32> to vector<8xf32>
    %119 = vector.shape_cast %118 : vector<8xf32> to vector<8x1xf32>
    %120 = vector.broadcast %119 : vector<8x1xf32> to vector<8x8xf32>
    %121 = arith.subf %117, %120 : vector<8x8xf32>
    %122 = math.exp %121 : vector<8x8xf32>
    %cst_56 = arith.constant dense<0.000000e+00> : vector<8xf32>
    %123 = vector.multi_reduction <add>, %122, %cst_56 [1] : vector<8x8xf32> to vector<8xf32>
    %124 = vector.shape_cast %123 : vector<8xf32> to vector<8x1xf32>
    %125 = tpu.reciprocal %124 {approx = true} : vector<8x1xf32> -> vector<8x1xf32>
    %126 = vector.broadcast %125 : vector<8x1xf32> to vector<8x8xf32>
    %127 = arith.mulf %122, %126 : vector<8x8xf32>
    %128 = arith.truncf %127 : vector<8x8xf32> to vector<8x8xbf16>
    %cst_57 = arith.constant dense<0.000000e+00> : vector<8x8xf32>
    %129 = tpu.matmul %128, %114, %cst_57 {dimension_numbers = #tpu.dot_dimension_numbers<[1], [0], [0], [1], [0, 0, 1, 1], [], []>} : vector<8x8xbf16>, vector<8x8xbf16>, vector<8x8xf32> -> vector<8x8xf32>
    %130 = arith.truncf %129 : vector<8x8xf32> to vector<8x8xbf16>
    %c3 = arith.constant 3 : index
    %c0_58 = arith.constant 0 : index
    %c0_59 = arith.constant 0 : index
    %131 = vector.load %arg5[%c3, %c0_58, %c0_59] : memref<4x8x32xbf16, #tpu.memory_space<vmem>>, vector<1x8x32xbf16>
    %132 = vector.shape_cast %131 : vector<1x8x32xbf16> to vector<8x32xbf16>
    %cst_60 = arith.constant dense<0.000000e+00> : vector<8x32xf32>
    %133 = tpu.matmul %130, %132, %cst_60 {dimension_numbers = #tpu.dot_dimension_numbers<[1], [0], [0], [1], [0, 0, 1, 1], [], []>} : vector<8x8xbf16>, vector<8x32xbf16>, vector<8x32xf32> -> vector<8x32xf32>
    %134 = arith.addf %111, %133 : vector<8x32xf32>
    %135 = arith.addf %1, %134 : vector<8x32xf32>
    %136 = vector.broadcast %6 : vector<1x32xf32> to vector<8x32xf32>
    %137 = arith.addf %135, %136 : vector<8x32xf32>
    %cst_61 = arith.constant dense<0.000000e+00> : vector<8xf32>
    %138 = vector.multi_reduction <add>, %137, %cst_61 [1] : vector<8x32xf32> to vector<8xf32>
    %139 = vector.shape_cast %138 : vector<8xf32> to vector<8x1xf32>
    %cst_62 = arith.constant 3.200000e+01 : f32
    %140 = vector.broadcast %cst_62 : f32 to vector<8x1xf32>
    %141 = arith.divf %139, %140 : vector<8x1xf32>
    %142 = vector.broadcast %141 : vector<8x1xf32> to vector<8x32xf32>
    %143 = arith.subf %137, %142 : vector<8x32xf32>
    %144 = arith.mulf %143, %143 : vector<8x32xf32>
    %cst_63 = arith.constant dense<0.000000e+00> : vector<8xf32>
    %145 = vector.multi_reduction <add>, %144, %cst_63 [1] : vector<8x32xf32> to vector<8xf32>
    %146 = vector.shape_cast %145 : vector<8xf32> to vector<8x1xf32>
    %cst_64 = arith.constant 3.200000e+01 : f32
    %147 = vector.broadcast %cst_64 : f32 to vector<8x1xf32>
    %148 = arith.divf %146, %147 : vector<8x1xf32>
    %149 = vector.broadcast %141 : vector<8x1xf32> to vector<8x32xf32>
    %150 = arith.subf %137, %149 : vector<8x32xf32>
    %cst_65 = arith.constant 9.99999974E-6 : f32
    %151 = vector.broadcast %cst_65 : f32 to vector<8x1xf32>
    %152 = arith.addf %148, %151 : vector<8x1xf32>
    %153 = math.rsqrt %152 : vector<8x1xf32>
    %154 = vector.broadcast %153 : vector<8x1xf32> to vector<8x32xf32>
    %155 = arith.mulf %150, %154 : vector<8x32xf32>
    %156 = vector.broadcast %4 : vector<1x32xf32> to vector<8x32xf32>
    %157 = arith.mulf %155, %156 : vector<8x32xf32>
    %158 = vector.broadcast %5 : vector<1x32xf32> to vector<8x32xf32>
    %159 = arith.addf %157, %158 : vector<8x32xf32>
    %160 = arith.truncf %159 : vector<8x32xf32> to vector<8x32xbf16>
    %cst_66 = arith.constant dense<0.000000e+00> : vector<8x128xf32>
    %161 = tpu.matmul %160, %10, %cst_66 {dimension_numbers = #tpu.dot_dimension_numbers<[1], [0], [0], [1], [0, 0, 1, 1], [], []>} : vector<8x32xbf16>, vector<32x128xbf16>, vector<8x128xf32> -> vector<8x128xf32>
    %162 = vector.broadcast %7 : vector<1x128xf32> to vector<8x128xf32>
    %163 = arith.addf %161, %162 : vector<8x128xf32>
    %cst_67 = arith.constant 5.000000e-01 : f32
    %164 = vector.broadcast %cst_67 : f32 to vector<8x128xf32>
    %165 = arith.mulf %164, %163 : vector<8x128xf32>
    %cst_68 = arith.constant 0.707106769 : f32
    %166 = vector.broadcast %cst_68 : f32 to vector<8x128xf32>
    %167 = arith.mulf %163, %166 : vector<8x128xf32>
    %168 = math.erf %167 : vector<8x128xf32>
    %cst_69 = arith.constant 1.000000e+00 : f32
    %169 = vector.broadcast %cst_69 : f32 to vector<8x128xf32>
    %170 = arith.addf %169, %168 : vector<8x128xf32>
    %171 = arith.mulf %165, %170 : vector<8x128xf32>
    %172 = arith.truncf %171 : vector<8x128xf32> to vector<8x128xbf16>
    %cst_70 = arith.constant dense<0.000000e+00> : vector<8x32xf32>
    %173 = tpu.matmul %172, %11, %cst_70 {dimension_numbers = #tpu.dot_dimension_numbers<[1], [0], [0], [1], [0, 0, 1, 1], [], []>} : vector<8x128xbf16>, vector<128x32xbf16>, vector<8x32xf32> -> vector<8x32xf32>
    %174 = vector.broadcast %8 : vector<1x32xf32> to vector<8x32xf32>
    %175 = arith.addf %173, %174 : vector<8x32xf32>
    %176 = arith.addf %137, %175 : vector<8x32xf32>
    %c0_71 = arith.constant 0 : index
    %c0_72 = arith.constant 0 : index
    %c0_73 = arith.constant 0 : index
    %177 = vector.load %arg13[%c0_71, %c0_72, %c0_73] : memref<1x8x32xf32, #tpu.memory_space<vmem>>, vector<1x8x32xf32>
    %178 = vector.shape_cast %177 : vector<1x8x32xf32> to vector<8x32xf32>
    %179 = vector.shape_cast %176 : vector<8x32xf32> to vector<1x8x32xf32>
    tpu.vector_store %arg13[%c0_71, %c0_72, %c0_73], %179 {strides = array<i32>} : memref<1x8x32xf32, #tpu.memory_space<vmem>>, vector<1x8x32xf32>,
    return
  }
  func.func @transform_0(%arg0: i32) -> (i32, i32, i32) {
    %c0_i32 = arith.constant 0 : i32
    %c0_i32_0 = arith.constant 0 : i32
    %c0_i32_1 = arith.constant 0 : i32
    return %arg0, %c0_i32, %c0_i32_0 : i32, i32, i32
  }
  func.func @transform_1(%arg0: i32) -> (i32, i32) {
    %c0_i32 = arith.constant 0 : i32
    %c0_i32_0 = arith.constant 0 : i32
    %c0_i32_1 = arith.constant 0 : i32
    return %c0_i32, %c0_i32_0 : i32, i32
  }
  func.func @transform_2(%arg0: i32) -> (i32, i32) {
    %c0_i32 = arith.constant 0 : i32
    %c0_i32_0 = arith.constant 0 : i32
    %c0_i32_1 = arith.constant 0 : i32
    return %c0_i32, %c0_i32_0 : i32, i32
  }
  func.func @transform_3(%arg0: i32) -> (i32, i32) {
    %c0_i32 = arith.constant 0 : i32
    %c0_i32_0 = arith.constant 0 : i32
    %c0_i32_1 = arith.constant 0 : i32
    return %c0_i32, %c0_i32_0 : i32, i32
  }
  func.func @transform_4(%arg0: i32) -> (i32, i32, i32) {
    %c0_i32 = arith.constant 0 : i32
    %c0_i32_0 = arith.constant 0 : i32
    %c0_i32_1 = arith.constant 0 : i32
    %c0_i32_2 = arith.constant 0 : i32
    return %c0_i32, %c0_i32_0, %c0_i32_1 : i32, i32, i32
  }
  func.func @transform_5(%arg0: i32) -> (i32, i32) {
    %c0_i32 = arith.constant 0 : i32
    %c0_i32_0 = arith.constant 0 : i32
    %c0_i32_1 = arith.constant 0 : i32
    return %c0_i32, %c0_i32_0 : i32, i32
  }
  func.func @transform_6(%arg0: i32) -> (i32, i32) {
    %c0_i32 = arith.constant 0 : i32
    %c0_i32_0 = arith.constant 0 : i32
    %c0_i32_1 = arith.constant 0 : i32
    return %c0_i32, %c0_i32_0 : i32, i32
  }
  func.func @transform_7(%arg0: i32) -> (i32, i32) {
    %c0_i32 = arith.constant 0 : i32
    %c0_i32_0 = arith.constant 0 : i32
    %c0_i32_1 = arith.constant 0 : i32
    return %c0_i32, %c0_i32_0 : i32, i32
  }
  func.func @transform_8(%arg0: i32) -> (i32, i32) {
    %c0_i32 = arith.constant 0 : i32
    %c0_i32_0 = arith.constant 0 : i32
    %c0_i32_1 = arith.constant 0 : i32
    return %c0_i32, %c0_i32_0 : i32, i32
  }
  func.func @transform_9(%arg0: i32) -> (i32, i32) {
    %c0_i32 = arith.constant 0 : i32
    %c0_i32_0 = arith.constant 0 : i32
    %c0_i32_1 = arith.constant 0 : i32
    return %c0_i32, %c0_i32_0 : i32, i32
  }
  func.func @transform_10(%arg0: i32) -> (i32, i32) {
    %c0_i32 = arith.constant 0 : i32
    %c0_i32_0 = arith.constant 0 : i32
    %c0_i32_1 = arith.constant 0 : i32
    return %c0_i32, %c0_i32_0 : i32, i32
  }
  func.func @transform_11(%arg0: i32) -> (i32, i32) {
    %c0_i32 = arith.constant 0 : i32
    %c0_i32_0 = arith.constant 0 : i32
    %c0_i32_1 = arith.constant 0 : i32
    return %c0_i32, %c0_i32_0 : i32, i32
  }
  func.func @transform_12(%arg0: i32) -> (i32, i32, i32) {
    %c0_i32 = arith.constant 0 : i32
    %c0_i32_0 = arith.constant 0 : i32
    %c0_i32_1 = arith.constant 0 : i32
    return %arg0, %c0_i32, %c0_i32_0 : i32, i32, i32
  }
}

</mosaic_0001>

<llo_original>
// kernel: tpu_custom_call.1
$region0: #{tpu_custom_call.1}
  #allocation0 [shape = 'u32[]', space=smem, size = 0x4, offset = 0x4, fixed_abs, tag = 'smem constant byte address 0x4 - core index']
  #allocation1 [shape = 'u32[144,128]{1,0:T(1,128)}', space=vmem, size = 0x12000, scoped, tag = 'internal scratch']
  %s0 = inlined_call_operand.vmem [shape: f32[2,8,32], index: 0, kind: input, shape index: {}]
  %s1 = inlined_call_operand.vmem [shape: f32[1,32], index: 1, kind: input, shape index: {}]
  %s2 = inlined_call_operand.vmem [shape: f32[1,32], index: 2, kind: input, shape index: {}]
  %s3 = inlined_call_operand.vmem [shape: bf16[32,96], index: 3, kind: input, shape index: {}]
  %s4 = inlined_call_operand.vmem [shape: bf16[4,8,32], index: 4, kind: input, shape index: {}]
  %s5 = inlined_call_operand.vmem [shape: f32[1,32], index: 5, kind: input, shape index: {}]
  %s6 = inlined_call_operand.vmem [shape: f32[1,32], index: 6, kind: input, shape index: {}]
  %s7 = inlined_call_operand.vmem [shape: f32[1,32], index: 7, kind: input, shape index: {}]
  %s8 = inlined_call_operand.vmem [shape: bf16[32,128], index: 8, kind: input, shape index: {}]
  %s9 = inlined_call_operand.vmem [shape: f32[1,128], index: 9, kind: input, shape index: {}]
  %s10 = inlined_call_operand.vmem [shape: bf16[128,32], index: 10, kind: input, shape index: {}]
  %s11 = inlined_call_operand.vmem [shape: f32[1,32], index: 11, kind: input, shape index: {}]
  %s12 = inlined_call_operand.hbm [shape: f32[2,8,32], index: 12, kind: output, shape index: {}]
  %s13 = sld [smem:[#allocation0]]
  $region81: #{tpu_custom_call.1} parent=0
    _
  %s15 = ssub.s32 1, %s13
  %s16 = scalar_select 0, %s15, %s13
  $region1: #{tpu_custom_call.1} parent=0
    #allocation2 [shape = 'u8[8192]{0}', space=vmem, size = 0x2000, scoped, tag = 'output window, operand 0']
    #allocation3 [shape = 's32[2]{0}', space=sflag, size = 0x8, scoped, tag = 'scoped memory for tpu_custom_call.1']
    %17 = vsyncpa [#allocation3], 0
    %s18 = scalar_lea.sflag [#allocation3], 1
    %19 = vsyncpa %s18, 0
    loop: start=0, step=1, limit=4
    $region2: #{tpu_custom_call.1} parent=1 // loop_pre_header
      _
    $region3: #{tpu_custom_call.1} parent=1 // loop_header
      %s21 = sphi 0, %s25
      %p22 = scmp.ge.s32.totalorder %s21, 4
      %s31 = sphi 0, %s33
      %s34 = sphi 0, %s31
      %s35 = sphi 0, %s34
      %s51 = sphi 0, %s35
      %s55 = sphi 0, %s55
      %s57 = sphi 0, %s55
      %s58 = sphi 0, %s57
      %s72 = sphi 0, %s58
      %s76 = sphi 0, %s76
      %s78 = sphi 0, %s76
      %s79 = sphi 0, %s78
      %s93 = sphi 0, %s79
      %s97 = sphi 0, %s97
      %s99 = sphi 0, %s97
      %s100 = sphi 0, %s99
      %s114 = sphi 0, %s100
      %s118 = sphi 0, %s118
      %s120 = sphi 0, %s118
      %s121 = sphi 0, %s120
      %s135 = sphi 0, %s121
      %s139 = sphi 0, %s139
      %s141 = sphi 0, %s139
      %s142 = sphi 0, %s141
      %s156 = sphi 0, %s142
      %s160 = sphi 0, %s160
      %s162 = sphi 0, %s160
      %s163 = sphi 0, %s162
      %s177 = sphi 0, %s163
      %s181 = sphi 0, %s181
      %s183 = sphi 0, %s181
      %s184 = sphi 0, %s183
      %s198 = sphi 0, %s184
      %s202 = sphi 0, %s202
      %s204 = sphi 0, %s202
      %s205 = sphi 0, %s204
      %s219 = sphi 0, %s205
      %s223 = sphi 0, %s223
      %s225 = sphi 0, %s223
      %s226 = sphi 0, %s225
      %s240 = sphi 0, %s226
      %s244 = sphi 0, %s244
      %s246 = sphi 0, %s244
      %s247 = sphi 0, %s246
      %s261 = sphi 0, %s247
      %s265 = sphi 0, %s265
      %s267 = sphi 0, %s265
      %s268 = sphi 0, %s267
      %s282 = sphi 0, %s268
      %s288 = sphi 0, %s290
      %s291 = sphi 0, %s288
      %s292 = sphi 0, %s291
      %s308 = sphi 0, %s292
    $region4: #{tpu_custom_call.1} parent=1 // loop_header_branch
      %24 = sbr.rel (%p22) target = $region8
    $region5: #{tpu_custom_call.1} parent=1 // loop_body
      %s26 = ssub.s32 %s21, 1
      %s27 = ssub.s32 %s21, 2
      %s28 = sadd.s32 %s21, 1
      %s29 = ssub.s32 %s21, %s28
      %p30 = scmp.eq.s32.totalorder %s29, 0
      %s32 = sadd.s32 %s31, 1
      %s33 = scalar_select %p30, %s31, %s32
      %p36 = pneg %p30
      %p37 = scmp.eq.s32.totalorder %s21, 1
      %p38 = por %p36, %p37
      %p39 = scmp.ne.s32.totalorder %s31, %s34
      %p40 = scmp.eq.s32.totalorder %s21, 0
      %p41 = por %p39, %p40
      %p42 = scmp.ne.s32.totalorder %s31, %s34
      %p43 = scmp.eq.s32.totalorder %s26, 1
      %p44 = por %p42, %p43
      %p45 = scmp.ne.s32.totalorder %s34, %s35
      %p46 = scmp.eq.s32.totalorder %s26, 0
      %p47 = por %p45, %p46
      %p48 = scmp.ne.s32.totalorder %s34, %s35
      %p49 = scmp.eq.s32.totalorder %s27, 1
      %p50 = por %p48, %p49
      %p52 = scmp.ne.s32.totalorder %s35, %s51
      %p53 = scmp.eq.s32.totalorder %s27, 0
      %p54 = por %p52, %p53
      %s56 = sadd.s32 %s55, 1
      %p59 = scmp.eq.s32.totalorder %s21, 1
      %p60 = scmp.ne.s32.totalorder %s55, %s57
      %p61 = scmp.eq.s32.totalorder %s21, 0
      %p62 = por %p60, %p61
      %p63 = scmp.ne.s32.totalorder %s55, %s57
      %p64 = scmp.eq.s32.totalorder %s26, 1
      %p65 = por %p63, %p64
      %p66 = scmp.ne.s32.totalorder %s57, %s58
      %p67 = scmp.eq.s32.totalorder %s26, 0
      %p68 = por %p66, %p67
      %p69 = scmp.ne.s32.totalorder %s57, %s58
      %p70 = scmp.eq.s32.totalorder %s27, 1
      %p71 = por %p69, %p70
      %p73 = scmp.ne.s32.totalorder %s58, %s72
      %p74 = scmp.eq.s32.totalorder %s27, 0
      %p75 = por %p73, %p74
      %s77 = sadd.s32 %s76, 1
      %p80 = scmp.eq.s32.totalorder %s21, 1
      %p81 = scmp.ne.s32.totalorder %s76, %s78
      %p82 = scmp.eq.s32.totalorder %s21, 0
      %p83 = por %p81, %p82
      %p84 = scmp.ne.s32.totalorder %s76, %s78
      %p85 = scmp.eq.s32.totalorder %s26, 1
      %p86 = por %p84, %p85
      %p87 = scmp.ne.s32.totalorder %s78, %s79
      %p88 = scmp.eq.s32.totalorder %s26, 0
      %p89 = por %p87, %p88
      %p90 = scmp.ne.s32.totalorder %s78, %s79
      %p91 = scmp.eq.s32.totalorder %s27, 1
      %p92 = por %p90, %p91
      %p94 = scmp.ne.s32.totalorder %s79, %s93
      %p95 = scmp.eq.s32.totalorder %s27, 0
      %p96 = por %p94, %p95
      %s98 = sadd.s32 %s97, 1
      %p101 = scmp.eq.s32.totalorder %s21, 1
      %p102 = scmp.ne.s32.totalorder %s97, %s99
      %p103 = scmp.eq.s32.totalorder %s21, 0
      %p104 = por %p102, %p103
      %p105 = scmp.ne.s32.totalorder %s97, %s99
      %p106 = scmp.eq.s32.totalorder %s26, 1
      %p107 = por %p105, %p106
      %p108 = scmp.ne.s32.totalorder %s99, %s100
      %p109 = scmp.eq.s32.totalorder %s26, 0
      %p110 = por %p108, %p109
      %p111 = scmp.ne.s32.totalorder %s99, %s100
      %p112 = scmp.eq.s32.totalorder %s27, 1
      %p113 = por %p111, %p112
      %p115 = scmp.ne.s32.totalorder %s100, %s114
      %p116 = scmp.eq.s32.totalorder %s27, 0
      %p117 = por %p115, %p116
      %s119 = sadd.s32 %s118, 1
      %p122 = scmp.eq.s32.totalorder %s21, 1
      %p123 = scmp.ne.s32.totalorder %s118, %s120
      %p124 = scmp.eq.s32.totalorder %s21, 0
      %p125 = por %p123, %p124
      %p126 = scmp.ne.s32.totalorder %s118, %s120
      %p127 = scmp.eq.s32.totalorder %s26, 1
      %p128 = por %p126, %p127
      %p129 = scmp.ne.s32.totalorder %s120, %s121
      %p130 = scmp.eq.s32.totalorder %s26, 0
      %p131 = por %p129, %p130
      %p132 = scmp.ne.s32.totalorder %s120, %s121
      %p133 = scmp.eq.s32.totalorder %s27, 1
      %p134 = por %p132, %p133
      %p136 = scmp.ne.s32.totalorder %s121, %s135
      %p137 = scmp.eq.s32.totalorder %s27, 0
      %p138 = por %p136, %p137
      %s140 = sadd.s32 %s139, 1
      %p143 = scmp.eq.s32.totalorder %s21, 1
      %p144 = scmp.ne.s32.totalorder %s139, %s141
      %p145 = scmp.eq.s32.totalorder %s21, 0
      %p146 = por %p144, %p145
      %p147 = scmp.ne.s32.totalorder %s139, %s141
      %p148 = scmp.eq.s32.totalorder %s26, 1
      %p149 = por %p147, %p148
      %p150 = scmp.ne.s32.totalorder %s141, %s142
      %p151 = scmp.eq.s32.totalorder %s26, 0
      %p152 = por %p150, %p151
      %p153 = scmp.ne.s32.totalorder %s141, %s142
      %p154 = scmp.eq.s32.totalorder %s27, 1
      %p155 = por %p153, %p154
      %p157 = scmp.ne.s32.totalorder %s142, %s156
      %p158 = scmp.eq.s32.totalorder %s27, 0
      %p159 = por %p157, %p158
      %s161 = sadd.s32 %s160, 1
      %p164 = scmp.eq.s32.totalorder %s21, 1
      %p165 = scmp.ne.s32.totalorder %s160, %s162
      %p166 = scmp.eq.s32.totalorder %s21, 0
      %p167 = por %p165, %p166
      %p168 = scmp.ne.s32.totalorder %s160, %s162
      %p169 = scmp.eq.s32.totalorder %s26, 1
      %p170 = por %p168, %p169
      %p171 = scmp.ne.s32.totalorder %s162, %s163
      %p172 = scmp.eq.s32.totalorder %s26, 0
      %p173 = por %p171, %p172
      %p174 = scmp.ne.s32.totalorder %s162, %s163
      %p175 = scmp.eq.s32.totalorder %s27, 1
      %p176 = por %p174, %p175
      %p178 = scmp.ne.s32.totalorder %s163, %s177
      %p179 = scmp.eq.s32.totalorder %s27, 0
      %p180 = por %p178, %p179
      %s182 = sadd.s32 %s181, 1
      %p185 = scmp.eq.s32.totalorder %s21, 1
      %p186 = scmp.ne.s32.totalorder %s181, %s183
      %p187 = scmp.eq.s32.totalorder %s21, 0
      %p188 = por %p186, %p187
      %p189 = scmp.ne.s32.totalorder %s181, %s183
      %p190 = scmp.eq.s32.totalorder %s26, 1
      %p191 = por %p189, %p190
      %p192 = scmp.ne.s32.totalorder %s183, %s184
      %p193 = scmp.eq.s32.totalorder %s26, 0
      %p194 = por %p192, %p193
      %p195 = scmp.ne.s32.totalorder %s183, %s184
      %p196 = scmp.eq.s32.totalorder %s27, 1
      %p197 = por %p195, %p196
      %p199 = scmp.ne.s32.totalorder %s184, %s198
      %p200 = scmp.eq.s32.totalorder %s27, 0
      %p201 = por %p199, %p200
      %s203 = sadd.s32 %s202, 1
      %p206 = scmp.eq.s32.totalorder %s21, 1
      %p207 = scmp.ne.s32.totalorder %s202, %s204
      %p208 = scmp.eq.s32.totalorder %s21, 0
      %p209 = por %p207, %p208
      %p210 = scmp.ne.s32.totalorder %s202, %s204
      %p211 = scmp.eq.s32.totalorder %s26, 1
      %p212 = por %p210, %p211
      %p213 = scmp.ne.s32.totalorder %s204, %s205
      %p214 = scmp.eq.s32.totalorder %s26, 0
      %p215 = por %p213, %p214
      %p216 = scmp.ne.s32.totalorder %s204, %s205
      %p217 = scmp.eq.s32.totalorder %s27, 1
      %p218 = por %p216, %p217
      %p220 = scmp.ne.s32.totalorder %s205, %s219
      %p221 = scmp.eq.s32.totalorder %s27, 0
      %p222 = por %p220, %p221
      %s224 = sadd.s32 %s223, 1
      %p227 = scmp.eq.s32.totalorder %s21, 1
      %p228 = scmp.ne.s32.totalorder %s223, %s225
      %p229 = scmp.eq.s32.totalorder %s21, 0
      %p230 = por %p228, %p229
      %p231 = scmp.ne.s32.totalorder %s223, %s225
      %p232 = scmp.eq.s32.totalorder %s26, 1
      %p233 = por %p231, %p232
      %p234 = scmp.ne.s32.totalorder %s225, %s226
      %p235 = scmp.eq.s32.totalorder %s26, 0
      %p236 = por %p234, %p235
      %p237 = scmp.ne.s32.totalorder %s225, %s226
      %p238 = scmp.eq.s32.totalorder %s27, 1
      %p239 = por %p237, %p238
      %p241 = scmp.ne.s32.totalorder %s226, %s240
      %p242 = scmp.eq.s32.totalorder %s27, 0
      %p243 = por %p241, %p242
      %s245 = sadd.s32 %s244, 1
      %p248 = scmp.eq.s32.totalorder %s21, 1
      %p249 = scmp.ne.s32.totalorder %s244, %s246
      %p250 = scmp.eq.s32.totalorder %s21, 0
      %p251 = por %p249, %p250
      %p252 = scmp.ne.s32.totalorder %s244, %s246
      %p253 = scmp.eq.s32.totalorder %s26, 1
      %p254 = por %p252, %p253
      %p255 = scmp.ne.s32.totalorder %s246, %s247
      %p256 = scmp.eq.s32.totalorder %s26, 0
      %p257 = por %p255, %p256
      %p258 = scmp.ne.s32.totalorder %s246, %s247
      %p259 = scmp.eq.s32.totalorder %s27, 1
      %p260 = por %p258, %p259
      %p262 = scmp.ne.s32.totalorder %s247, %s261
      %p263 = scmp.eq.s32.totalorder %s27, 0
      %p264 = por %p262, %p263
      %s266 = sadd.s32 %s265, 1
      %p269 = scmp.eq.s32.totalorder %s21, 1
      %p270 = scmp.ne.s32.totalorder %s265, %s267
      %p271 = scmp.eq.s32.totalorder %s21, 0
      %p272 = por %p270, %p271
      %p273 = scmp.ne.s32.totalorder %s265, %s267
      %p274 = scmp.eq.s32.totalorder %s26, 1
      %p275 = por %p273, %p274
      %p276 = scmp.ne.s32.totalorder %s267, %s268
      %p277 = scmp.eq.s32.totalorder %s26, 0
      %p278 = por %p276, %p277
      %p279 = scmp.ne.s32.totalorder %s267, %s268
      %p280 = scmp.eq.s32.totalorder %s27, 1
      %p281 = por %p279, %p280
      %p283 = scmp.ne.s32.totalorder %s268, %s282
      %p284 = scmp.eq.s32.totalorder %s27, 0
      %p285 = por %p283, %p284
      %s286 = ssub.s32 %s21, %s28
      %p287 = scmp.eq.s32.totalorder %s286, 0
      %s289 = sadd.s32 %s288, 1
      %s290 = scalar_select %p287, %s288, %s289
      %p293 = pneg %p287
      %p294 = scmp.eq.s32.totalorder %s21, 1
      %p295 = por %p293, %p294
      %p296 = scmp.ne.s32.totalorder %s288, %s291
      %p297 = scmp.eq.s32.totalorder %s21, 0
      %p298 = por %p296, %p297
      %p299 = scmp.ne.s32.totalorder %s288, %s291
      %p300 = scmp.eq.s32.totalorder %s26, 1
      %p301 = por %p299, %p300
      %p302 = scmp.ne.s32.totalorder %s291, %s292
      %p303 = scmp.eq.s32.totalorder %s26, 0
      %p304 = por %p302, %p303
      %p305 = scmp.ne.s32.totalorder %s291, %s292
      %p306 = scmp.eq.s32.totalorder %s27, 1
      %p307 = por %p305, %p306
      %p309 = scmp.ne.s32.totalorder %s292, %s308
      %p310 = scmp.eq.s32.totalorder %s27, 0
      %p311 = por %p309, %p310
      %p312 = scmp.le.s32.totalorder 1, %s21
      %p313 = scmp.lt.s32.totalorder %s21, 3
      %p314 = pnand %p312, %p313
      %p315 = pneg %p314
      // Predicated region
      $region9: #{tpu_custom_call.1} parent=5 // pred_check
        _
      $region10: #{tpu_custom_call.1} parent=5 // pred_check_branch
        %317 = sbr.rel (%p314) target = $region12
      $region11: #{tpu_custom_call.1} parent=5 // pred_region
        %s318 = ssub.s32 %s21, 1
        // Predicated region
        $region13: #{tpu_custom_call.1} parent=11 // pred_check
          %p319 = pneg %p68
        $region14: #{tpu_custom_call.1} parent=11 // pred_check_branch
          %321 = sbr.rel (%p319) target = $region16
        $region15: #{tpu_custom_call.1} parent=11 // pred_region
          _
        $region16: #{tpu_custom_call.1} parent=11 // pred_fallthru
          _
        // Predicated region
        $region17: #{tpu_custom_call.1} parent=11 // pred_check
          %p322 = pneg %p89
        $region18: #{tpu_custom_call.1} parent=11 // pred_check_branch
          %324 = sbr.rel (%p322) target = $region20
        $region19: #{tpu_custom_call.1} parent=11 // pred_region
          _
        $region20: #{tpu_custom_call.1} parent=11 // pred_fallthru
          _
        // Predicated region
        $region21: #{tpu_custom_call.1} parent=11 // pred_check
          %p325 = pneg %p110
        $region22: #{tpu_custom_call.1} parent=11 // pred_check_branch
          %327 = sbr.rel (%p325) target = $region24
        $region23: #{tpu_custom_call.1} parent=11 // pred_region
          _
        $region24: #{tpu_custom_call.1} parent=11 // pred_fallthru
          _
        // Predicated region
        $region25: #{tpu_custom_call.1} parent=11 // pred_check
          %p328 = pneg %p131
        $region26: #{tpu_custom_call.1} parent=11 // pred_check_branch
          %330 = sbr.rel (%p328) target = $region28
        $region27: #{tpu_custom_call.1} parent=11 // pred_region
          _
        $region28: #{tpu_custom_call.1} parent=11 // pred_fallthru
          _
        // Predicated region
        $region29: #{tpu_custom_call.1} parent=11 // pred_check
          %p331 = pneg %p152
        $region30: #{tpu_custom_call.1} parent=11 // pred_check_branch
          %333 = sbr.rel (%p331) target = $region32
        $region31: #{tpu_custom_call.1} parent=11 // pred_region
          _
        $region32: #{tpu_custom_call.1} parent=11 // pred_fallthru
          _
        // Predicated region
        $region33: #{tpu_custom_call.1} parent=11 // pred_check
          %p334 = pneg %p173
        $region34: #{tpu_custom_call.1} parent=11 // pred_check_branch
          %336 = sbr.rel (%p334) target = $region36
        $region35: #{tpu_custom_call.1} parent=11 // pred_region
          _
        $region36: #{tpu_custom_call.1} parent=11 // pred_fallthru
          _
        // Predicated region
        $region37: #{tpu_custom_call.1} parent=11 // pred_check
          %p337 = pneg %p194
        $region38: #{tpu_custom_call.1} parent=11 // pred_check_branch
          %339 = sbr.rel (%p337) target = $region40
        $region39: #{tpu_custom_call.1} parent=11 // pred_region
          _
        $region40: #{tpu_custom_call.1} parent=11 // pred_fallthru
          _
        // Predicated region
        $region41: #{tpu_custom_call.1} parent=11 // pred_check
          %p340 = pneg %p215
        $region42: #{tpu_custom_call.1} parent=11 // pred_check_branch
          %342 = sbr.rel (%p340) target = $region44
        $region43: #{tpu_custom_call.1} parent=11 // pred_region
          _
        $region44: #{tpu_custom_call.1} parent=11 // pred_fallthru
          _
        // Predicated region
        $region45: #{tpu_custom_call.1} parent=11 // pred_check
          %p343 = pneg %p236
        $region46: #{tpu_custom_call.1} parent=11 // pred_check_branch
          %345 = sbr.rel (%p343) target = $region48
        $region47: #{tpu_custom_call.1} parent=11 // pred_region
          _
        $region48: #{tpu_custom_call.1} parent=11 // pred_fallthru
          _
        // Predicated region
        $region49: #{tpu_custom_call.1} parent=11 // pred_check
          %p346 = pneg %p257
        $region50: #{tpu_custom_call.1} parent=11 // pred_check_branch
          %348 = sbr.rel (%p346) target = $region52
        $region51: #{tpu_custom_call.1} parent=11 // pred_region
          _
        $region52: #{tpu_custom_call.1} parent=11 // pred_fallthru
          _
        // Predicated region
        $region53: #{tpu_custom_call.1} parent=11 // pred_check
          %p349 = pneg %p278
        $region54: #{tpu_custom_call.1} parent=11 // pred_check_branch
          %351 = sbr.rel (%p349) target = $region56
        $region55: #{tpu_custom_call.1} parent=11 // pred_region
          _
        $region56: #{tpu_custom_call.1} parent=11 // pred_fallthru
          _
      $region12: #{tpu_custom_call.1} parent=5 // pred_fallthru
        _
      %p352 = scmp.lt.s32.totalorder %s21, 2
      // Predicated region
      $region57: #{tpu_custom_call.1} parent=5 // pred_check
        %p353 = pneg %p352
      $region58: #{tpu_custom_call.1} parent=5 // pred_check_branch
        %355 = sbr.rel (%p353) target = $region60
      $region59: #{tpu_custom_call.1} parent=5 // pred_region
        // Predicated region
        $region61: #{tpu_custom_call.1} parent=59 // pred_check
          %p356 = pneg %p41
        $region62: #{tpu_custom_call.1} parent=59 // pred_check_branch
          %358 = sbr.rel (%p356) target = $region64
        $region63: #{tpu_custom_call.1} parent=59 // pred_region
          %p359 = scmp.lt.s32.totalorder %s21, 1
          %s360 = scalar_select %p359, %s21, 1
          %s361 = smul.addr %s360, 8
          %s362 = scalar_lea.vmem %s0, %s361
        $region64: #{tpu_custom_call.1} parent=59 // pred_fallthru
          _
      $region60: #{tpu_custom_call.1} parent=5 // pred_fallthru
        _
      %p363 = scmp.le.s32.totalorder 1, %s21
      %p364 = scmp.lt.s32.totalorder %s21, 3
      %p365 = pnand %p363, %p364
      %p366 = pneg %p365
      // Predicated region
      $region65: #{tpu_custom_call.1} parent=5 // pred_check
        _
      $region66: #{tpu_custom_call.1} parent=5 // pred_check_branch
        %368 = sbr.rel (%p365) target = $region68
      $region67: #{tpu_custom_call.1} parent=5 // pred_region
        %s369 = ssub.s32 %s21, 1
        %p370 = scmp.lt.s32.totalorder %s26, 1
        %s371 = scalar_select %p370, %s26, 1
        %s372 = smul.addr %s371, 8
        %s373 = scalar_lea.vmem %s0, %s372
        %p374 = pneg %p47
        %p375 = pneg %p44
        %p376 = pneg %p68
        %p377 = pneg %p65
        %p378 = pneg %p89
        %p379 = pneg %p86
        %p380 = pneg %p110
        %p381 = pneg %p107
        %p382 = pneg %p131
        %p383 = pneg %p128
        %p384 = pneg %p152
        %p385 = pneg %p149
        %p386 = pneg %p173
        %p387 = pneg %p170
        %p388 = pneg %p194
        %p389 = pneg %p191
        %p390 = pneg %p215
        %p391 = pneg %p212
        %p392 = pneg %p236
        %p393 = pneg %p233
        %p394 = pneg %p257
        %p395 = pneg %p254
        %p396 = pneg %p278
        %p397 = pneg %p275
        %p398 = pneg %p304
        %p399 = pneg %p301
        %s400 = sand.u32 %s291, 1
        %s401 = scalar_lea.sflag [#allocation3], %s400
        %s402 = sand.u32 %s291, 1
        %s403 = smul.addr %s402, 8
        %s404 = scalar_lea.vmem [#allocation2], %s403
        %p405 = scmp.lt.s32.totalorder %s26, 1
        %s406 = scalar_select %p405, %s26, 1
        %s407 = smul.addr %s406, 8
        %s408 = scalar_lea.vmem %s0, %s407
        %v410 = vld [vmem:[%s408] sm:$0xff]
        %v411 = vld [vmem:[%s1] sm:$0x1]
        %v412 = vld [vmem:[%s2] sm:$0x1]
        %v413 = vld [vmem:[%s6] sm:$0x1]
        %v414 = vld [vmem:[%s7] sm:$0x1]
        %v415 = vld [vmem:[%s5] sm:$0x1]
        %v416 = vld [vmem:[%s9] sm:$0x1]
        %v417 = vld [vmem:[%s11] sm:$0x1]
        %v418 = vld [vmem:[%s3] sm:$0xf]
        %v419 = vld [vmem:[%s3 + $0x4] sm:$0xf]
        %v420 = vld [vmem:[%s3 + $0x8] sm:$0xf]
        %v421 = vld [vmem:[%s3 + $0xc] sm:$0xf]
        %v422 = vld [vmem:[%s8] sm:$0xf]
        %v423 = vld [vmem:[%s8 + $0x4] sm:$0xf]
        %v424 = vld [vmem:[%s8 + $0x8] sm:$0xf]
        %v425 = vld [vmem:[%s8 + $0xc] sm:$0xf]
        %v426 = vld [vmem:[%s10] sm:$0xf]
        %v427 = vld [vmem:[%s10 + $0x4] sm:$0xf]
        %v428 = vld [vmem:[%s10 + $0x8] sm:$0xf]
        %v429 = vld [vmem:[%s10 + $0xc] sm:$0xf]
        %v430 = vld [vmem:[%s10 + $0x10] sm:$0xf]
        %v431 = vld [vmem:[%s10 + $0x14] sm:$0xf]
        %v432 = vld [vmem:[%s10 + $0x18] sm:$0xf]
        %v433 = vld [vmem:[%s10 + $0x1c] sm:$0xf]
        %v434 = vld [vmem:[%s10 + $0x20] sm:$0xf]
        %v435 = vld [vmem:[%s10 + $0x24] sm:$0xf]
        %v436 = vld [vmem:[%s10 + $0x28] sm:$0xf]
        %v437 = vld [vmem:[%s10 + $0x2c] sm:$0xf]
        %v438 = vld [vmem:[%s10 + $0x30] sm:$0xf]
        %v439 = vld [vmem:[%s10 + $0x34] sm:$0xf]
        %v440 = vld [vmem:[%s10 + $0x38] sm:$0xf]
        %v441 = vld [vmem:[%s10 + $0x3c] sm:$0xf]
        %vm442 = vcmask 261120
        %v443 = vsel %vm442, %v410, 0.0
        %444 = vadd.xlane.f32.xlu0 %v443
        %v445 = vpop.xlane.xlu0 %444
        %v446 = vrcp.pop 32.0
        %v447 = vmul.f32 %v445, %v446
        %v448 = vsub.f32 %v410, %v447
        %v449 = vmul.f32 %v448, %v448
        %v450 = vsel %vm442, %v449, 0.0
        %451 = vadd.xlane.f32.xlu0 %v450
        %v452 = vpop.xlane.xlu0 %451
        %v453 = vmul.f32 %v452, %v446
        %v454 = vadd.f32 %v453, 1e-05
        %v455 = vrsqrt.pop %v454
        %v456 = vmul.f32 %v448, %v455
        %v458 = vlaneseq
        %v459 = vshrl.u32 %v458, 7
        %v460 = vsub.s32 0, %v459
        %v461 = vrot.slane %v411, %v460
        %v463 = vmul.f32 %v456, %v461
        %v465 = vlaneseq
        %v466 = vshrl.u32 %v465, 7
        %v467 = vsub.s32 0, %v466
        %v468 = vrot.slane %v412, %v467
        %v470 = vadd.f32 %v463, %v468
        %v471 = vpack.c.bf16 %v470, %v470
        %v476 = vunpack.c.l.b16 %v418
        %v477 = vunpack.c.l.b16 %v419
        %v478 = vunpack.c.l.b16 %v420
        %v479 = vunpack.c.l.b16 %v421
        %v480 = vpack.c.b16 %v477, %v476
        %v481 = vpack.c.b16 %v479, %v478
        %v485 = vsel %vm442, %v471, 0
        %487 = vmatprep.subr.bf16.mxu0 0
        %488 = vmatpush1.bf16.msra.mxu0 0
        %489 = vmatprep.subr.bf16.mxu0 0
        %490 = vmatpush1.bf16.msra.mxu0 0
        %491 = vmatprep.subr.bf16.mxu0 0
        %492 = vmatpush1.bf16.msra.mxu0 0
        %493 = vmatprep.subr.bf16.mxu0 0
        %494 = vmatpush1.bf16.msra.mxu0 0
        %495 = vmatprep.subr.bf16.mxu0 0
        %496 = vmatpush1.bf16.msra.mxu0 0
        %497 = vmatprep.subr.bf16.mxu0 0
        %498 = vmatpush1.bf16.msra.mxu0 0
        %499 = vmatprep.subr.bf16.mxu0 0
        %500 = vmatpush1.bf16.msra.mxu0 %v481
        %501 = vmatprep.subr.bf16.mxu0 0
        %502 = vmatpush1.bf16.msra.mxu0 %v480
        %503 = vmatprep.subr.bf16.mxu0 0
        %504 = vmatpush2.bf16.msra.mxu0 0
        %505 = vmatprep.subr.bf16.mxu0 0
        %506 = vmatpush2.bf16.msra.mxu0 0
        %507 = vmatprep.subr.bf16.mxu0 0
        %508 = vmatpush2.bf16.msra.mxu0 0
        %509 = vmatprep.subr.bf16.mxu0 0
        %510 = vmatpush2.bf16.msra.mxu0 0
        %511 = vmatprep.subr.bf16.mxu0 0
        %512 = vmatpush2.bf16.msra.mxu0 0
        %513 = vmatprep.subr.bf16.mxu0 0
        %514 = vmatpush2.bf16.msra.mxu0 0
        %515 = vmatprep.subr.bf16.mxu0 0
        %516 = vmatpush2.bf16.msra.mxu0 0
        %517 = vmatprep.subr.bf16.mxu0 0
        %518 = vmatpush2.bf16.msra.mxu0 0
        %519 = vmatprep.mubr.bf16.mxu0 0
        %520 = vmatmul.mubr.bf16.gmra.mxu0 %v485
        %v521 = vpop.f32.mrf.mxu0
        %v522 = vadd.f32 0.0, %v521
        %v523 = vpop.f32.mrf.mxu0
        %v524 = vpop.f32.mrf.mxu0
        %v525 = vpop.f32.mrf.mxu0
        %526 = vdwg.mxu0
        %v527 = vpack.c.bf16 %v522, %v522
        %529 = vrot.lane.b32.xlu0 %v527, 96
        %v530 = vpop.permute.xlu0 %529
        %vm531 = vcmask 64512
        %v533 = vsel %vm531, %v527, 0
        %v536 = vsel %vm531, %v530, 0
        %538 = vmatprep.subr.bf16.mxu0 0
        %539 = vmatpush1.bf16.xpose.msra.mxu0 0
        %540 = vmatprep.subr.bf16.mxu0 0
        %541 = vmatpush1.bf16.xpose.msra.mxu0 0
        %542 = vmatprep.subr.bf16.mxu0 0
        %543 = vmatpush1.bf16.xpose.msra.mxu0 0
        %544 = vmatprep.subr.bf16.mxu0 0
        %545 = vmatpush1.bf16.xpose.msra.mxu0 0
        %546 = vmatprep.subr.bf16.mxu0 0
        %547 = vmatpush1.bf16.xpose.msra.mxu0 0
        %548 = vmatprep.subr.bf16.mxu0 0
        %549 = vmatpush1.bf16.xpose.msra.mxu0 0
        %550 = vmatprep.subr.bf16.mxu0 0
        %551 = vmatpush1.bf16.xpose.msra.mxu0 0
        %552 = vmatprep.subr.bf16.mxu0 0
        %553 = vmatpush1.bf16.xpose.msra.mxu0 %v536
        %554 = vmatprep.subr.bf16.mxu0 0
        %555 = vmatpush2.bf16.xpose.msra.mxu0 0
        %556 = vmatprep.subr.bf16.mxu0 0
        %557 = vmatpush2.bf16.xpose.msra.mxu0 0
        %558 = vmatprep.subr.bf16.mxu0 0
        %559 = vmatpush2.bf16.xpose.msra.mxu0 0
        %560 = vmatprep.subr.bf16.mxu0 0
        %561 = vmatpush2.bf16.xpose.msra.mxu0 0
        %562 = vmatprep.subr.bf16.mxu0 0
        %563 = vmatpush2.bf16.xpose.msra.mxu0 0
        %564 = vmatprep.subr.bf16.mxu0 0
        %565 = vmatpush2.bf16.xpose.msra.mxu0 0
        %566 = vmatprep.subr.bf16.mxu0 0
        %567 = vmatpush2.bf16.xpose.msra.mxu0 0
        %568 = vmatprep.subr.bf16.mxu0 0
        %569 = vmatpush2.bf16.xpose.msra.mxu0 0
        %570 = vmatprep.mubr.bf16.mxu0 0
        %571 = vmatmul.mubr.bf16.gmra.mxu0 %v533
        %v572 = vpop.f32.mrf.mxu0
        %v573 = vadd.f32 0.0, %v572
        %v574 = vpop.f32.mrf.mxu0
        %v575 = vpop.f32.mrf.mxu0
        %v576 = vpop.f32.mrf.mxu0
        %577 = vdwg.mxu0
        %v578 = vmul.f32 %v573, 0.35355338
        %v579 = vsel %vm531, %v578, -inf
        %580 = vmax.xlane.f32.xlu0 %v579
        %v581 = vpop.xlane.xlu0 %580
        %v582 = vsub.f32 %v578, %v581
        %v583 = vmul.f32 %v582, 1.442695
        %v584 = vpow.pop %v583
        %v585 = vsel %vm531, %v584, 0.0
        %586 = vadd.xlane.f32.xlu0 %v585
        %v587 = vpop.xlane.xlu0 %586
        %v588 = vrcp.pop %v587
        %v589 = vmul.f32 %v584, %v588
        %v590 = vpack.c.bf16 %v589, %v589
        %591 = vrot.lane.b32.xlu0 %v527, 64
        %v592 = vpop.permute.xlu0 %591
        %v594 = vsel %vm531, %v590, 0
        %vm596 = vcmask 1043456
        %v598 = vsel %vm596, %v592, 0
        %600 = vmatprep.subr.bf16.mxu0 0
        %601 = vmatpush1.bf16.msra.mxu0 0
        %602 = vmatprep.subr.bf16.mxu0 0
        %603 = vmatpush1.bf16.msra.mxu0 0
        %604 = vmatprep.subr.bf16.mxu0 0
        %605 = vmatpush1.bf16.msra.mxu0 0
        %606 = vmatprep.subr.bf16.mxu0 0
        %607 = vmatpush1.bf16.msra.mxu0 0
        %608 = vmatprep.subr.bf16.mxu0 0
        %609 = vmatpush1.bf16.msra.mxu0 0
        %610 = vmatprep.subr.bf16.mxu0 0
        %611 = vmatpush1.bf16.msra.mxu0 0
        %612 = vmatprep.subr.bf16.mxu0 0
        %613 = vmatpush1.bf16.msra.mxu0 0
        %614 = vmatprep.subr.bf16.mxu0 0
        %615 = vmatpush1.bf16.msra.mxu0 %v598
        %616 = vmatprep.subr.bf16.mxu0 0
        %617 = vmatpush2.bf16.msra.mxu0 0
        %618 = vmatprep.subr.bf16.mxu0 0
        %619 = vmatpush2.bf16.msra.mxu0 0
        %620 = vmatprep.subr.bf16.mxu0 0
        %621 = vmatpush2.bf16.msra.mxu0 0
        %622 = vmatprep.subr.bf16.mxu0 0
        %623 = vmatpush2.bf16.msra.mxu0 0
        %624 = vmatprep.subr.bf16.mxu0 0
        %625 = vmatpush2.bf16.msra.mxu0 0
        %626 = vmatprep.subr.bf16.mxu0 0
        %627 = vmatpush2.bf16.msra.mxu0 0
        %628 = vmatprep.subr.bf16.mxu0 0
        %629 = vmatpush2.bf16.msra.mxu0 0
        %630 = vmatprep.subr.bf16.mxu0 0
        %631 = vmatpush2.bf16.msra.mxu0 0
        %632 = vmatprep.mubr.bf16.mxu0 0
        %633 = vmatmul.mubr.bf16.gmra.mxu0 %v594
        %v634 = vpop.f32.mrf.mxu0
        %v635 = vadd.f32 0.0, %v634
        %v636 = vpop.f32.mrf.mxu0
        %v637 = vpop.f32.mrf.mxu0
        %v638 = vpop.f32.mrf.mxu0
        %639 = vdwg.mxu0
        %v640 = vpack.c.bf16 %v635, %v635
        %v641 = vld [vmem:[%s4] sm:$0xf]
        %642 = vrot.lane.b32.xlu0 %v527, 120
        %v643 = vpop.permute.xlu0 %642
        %644 = vrot.lane.b32.xlu0 %v527, 88
        %v645 = vpop.permute.xlu0 %644
        %v647 = vsel %vm531, %v643, 0
        %v650 = vsel %vm531, %v645, 0
        %652 = vmatprep.subr.bf16.mxu0 0
        %653 = vmatpush1.bf16.xpose.msra.mxu0 0
        %654 = vmatprep.subr.bf16.mxu0 0
        %655 = vmatpush1.bf16.xpose.msra.mxu0 0
        %656 = vmatprep.subr.bf16.mxu0 0
        %657 = vmatpush1.bf16.xpose.msra.mxu0 0
        %658 = vmatprep.subr.bf16.mxu0 0
        %659 = vmatpush1.bf16.xpose.msra.mxu0 0
        %660 = vmatprep.subr.bf16.mxu0 0
        %661 = vmatpush1.bf16.xpose.msra.mxu0 0
        %662 = vmatprep.subr.bf16.mxu0 0
        %663 = vmatpush1.bf16.xpose.msra.mxu0 0
        %664 = vmatprep.subr.bf16.mxu0 0
        %665 = vmatpush1.bf16.xpose.msra.mxu0 0
        %666 = vmatprep.subr.bf16.mxu0 0
        %667 = vmatpush1.bf16.xpose.msra.mxu0 %v650
        %668 = vmatprep.subr.bf16.mxu0 0
        %669 = vmatpush2.bf16.xpose.msra.mxu0 0
        %670 = vmatprep.subr.bf16.mxu0 0
        %671 = vmatpush2.bf16.xpose.msra.mxu0 0
        %672 = vmatprep.subr.bf16.mxu0 0
        %673 = vmatpush2.bf16.xpose.msra.mxu0 0
        %674 = vmatprep.subr.bf16.mxu0 0
        %675 = vmatpush2.bf16.xpose.msra.mxu0 0
        %676 = vmatprep.subr.bf16.mxu0 0
        %677 = vmatpush2.bf16.xpose.msra.mxu0 0
        %678 = vmatprep.subr.bf16.mxu0 0
        %679 = vmatpush2.bf16.xpose.msra.mxu0 0
        %680 = vmatprep.subr.bf16.mxu0 0
        %681 = vmatpush2.bf16.xpose.msra.mxu0 0
        %682 = vmatprep.subr.bf16.mxu0 0
        %683 = vmatpush2.bf16.xpose.msra.mxu0 0
        %684 = vmatprep.mubr.bf16.mxu0 0
        %685 = vmatmul.mubr.bf16.gmra.mxu0 %v647
        %v686 = vpop.f32.mrf.mxu0
        %v687 = vadd.f32 0.0, %v686
        %v688 = vpop.f32.mrf.mxu0
        %v689 = vpop.f32.mrf.mxu0
        %v690 = vpop.f32.mrf.mxu0
        %691 = vdwg.mxu0
        %v692 = vmul.f32 %v687, 0.35355338
        %v693 = vsel %vm531, %v692, -inf
        %694 = vmax.xlane.f32.xlu0 %v693
        %v695 = vpop.xlane.xlu0 %694
        %v696 = vsub.f32 %v692, %v695
        %v697 = vmul.f32 %v696, 1.442695
        %v698 = vpow.pop %v697
        %v699 = vsel %vm531, %v698, 0.0
        %700 = vadd.xlane.f32.xlu0 %v699
        %v701 = vpop.xlane.xlu0 %700
        %v702 = vrcp.pop %v701
        %v703 = vmul.f32 %v698, %v702
        %v704 = vpack.c.bf16 %v703, %v703
        %705 = vrot.lane.b32.xlu0 %v527, 56
        %v706 = vpop.permute.xlu0 %705
        %v708 = vsel %vm531, %v704, 0
        %v711 = vsel %vm596, %v706, 0
        %713 = vmatprep.subr.bf16.mxu0 0
        %714 = vmatpush1.bf16.msra.mxu0 0
        %715 = vmatprep.subr.bf16.mxu0 0
        %716 = vmatpush1.bf16.msra.mxu0 0
        %717 = vmatprep.subr.bf16.mxu0 0
        %718 = vmatpush1.bf16.msra.mxu0 0
        %719 = vmatprep.subr.bf16.mxu0 0
        %720 = vmatpush1.bf16.msra.mxu0 0
        %721 = vmatprep.subr.bf16.mxu0 0
        %722 = vmatpush1.bf16.msra.mxu0 0
        %723 = vmatprep.subr.bf16.mxu0 0
        %724 = vmatpush1.bf16.msra.mxu0 0
        %725 = vmatprep.subr.bf16.mxu0 0
        %726 = vmatpush1.bf16.msra.mxu0 0
        %727 = vmatprep.subr.bf16.mxu0 0
        %728 = vmatpush1.bf16.msra.mxu0 %v711
        %729 = vmatprep.subr.bf16.mxu0 0
        %730 = vmatpush2.bf16.msra.mxu0 0
        %731 = vmatprep.subr.bf16.mxu0 0
        %732 = vmatpush2.bf16.msra.mxu0 0
        %733 = vmatprep.subr.bf16.mxu0 0
        %734 = vmatpush2.bf16.msra.mxu0 0
        %735 = vmatprep.subr.bf16.mxu0 0
        %736 = vmatpush2.bf16.msra.mxu0 0
        %737 = vmatprep.subr.bf16.mxu0 0
        %738 = vmatpush2.bf16.msra.mxu0 0
        %739 = vmatprep.subr.bf16.mxu0 0
        %740 = vmatpush2.bf16.msra.mxu0 0
        %741 = vmatprep.subr.bf16.mxu0 0
        %742 = vmatpush2.bf16.msra.mxu0 0
        %743 = vmatprep.subr.bf16.mxu0 0
        %744 = vmatpush2.bf16.msra.mxu0 0
        %745 = vmatprep.mubr.bf16.mxu0 0
        %746 = vmatmul.mubr.bf16.gmra.mxu0 %v708
        %v747 = vpop.f32.mrf.mxu0
        %v748 = vadd.f32 0.0, %v747
        %v749 = vpop.f32.mrf.mxu0
        %v750 = vpop.f32.mrf.mxu0
        %v751 = vpop.f32.mrf.mxu0
        %752 = vdwg.mxu0
        %v753 = vpack.c.bf16 %v748, %v748
        %s754 = scalar_lea.vmem %s4, 4
        %v755 = vld [vmem:[%s754] sm:$0xf]
        %v757 = vsel %vm531, %v753, 0
        %v760 = vsel %vm596, %v755, 0
        %762 = vmatprep.subr.bf16.mxu0 0
        %763 = vmatpush1.bf16.msra.mxu0 0
        %764 = vmatprep.subr.bf16.mxu0 0
        %765 = vmatpush1.bf16.msra.mxu0 0
        %766 = vmatprep.subr.bf16.mxu0 0
        %767 = vmatpush1.bf16.msra.mxu0 0
        %768 = vmatprep.subr.bf16.mxu0 0
        %769 = vmatpush1.bf16.msra.mxu0 0
        %770 = vmatprep.subr.bf16.mxu0 0
        %771 = vmatpush1.bf16.msra.mxu0 0
        %772 = vmatprep.subr.bf16.mxu0 0
        %773 = vmatpush1.bf16.msra.mxu0 0
        %774 = vmatprep.subr.bf16.mxu0 0
        %775 = vmatpush1.bf16.msra.mxu0 0
        %776 = vmatprep.subr.bf16.mxu0 0
        %777 = vmatpush1.bf16.msra.mxu0 %v760
        %778 = vmatprep.subr.bf16.mxu0 0
        %779 = vmatpush2.bf16.msra.mxu0 0
        %780 = vmatprep.subr.bf16.mxu0 0
        %781 = vmatpush2.bf16.msra.mxu0 0
        %782 = vmatprep.subr.bf16.mxu0 0
        %783 = vmatpush2.bf16.msra.mxu0 0
        %784 = vmatprep.subr.bf16.mxu0 0
        %785 = vmatpush2.bf16.msra.mxu0 0
        %786 = vmatprep.subr.bf16.mxu0 0
        %787 = vmatpush2.bf16.msra.mxu0 0
        %788 = vmatprep.subr.bf16.mxu0 0
        %789 = vmatpush2.bf16.msra.mxu0 0
        %790 = vmatprep.subr.bf16.mxu0 0
        %791 = vmatpush2.bf16.msra.mxu0 0
        %792 = vmatprep.subr.bf16.mxu0 0
        %793 = vmatpush2.bf16.msra.mxu0 0
        %794 = vmatprep.mubr.bf16.mxu0 0
        %795 = vmatmul.mubr.bf16.gmra.mxu0 %v757
        %v796 = vpop.f32.mrf.mxu0
        %v797 = vadd.f32 0.0, %v796
        %v798 = vpop.f32.mrf.mxu0
        %v799 = vpop.f32.mrf.mxu0
        %v800 = vpop.f32.mrf.mxu0
        %801 = vdwg.mxu0
        %v803 = vsel %vm531, %v640, 0
        %v806 = vsel %vm596, %v641, 0
        %808 = vmatprep.subr.bf16.mxu0 0
        %809 = vmatpush1.bf16.msra.mxu0 0
        %810 = vmatprep.subr.bf16.mxu0 0
        %811 = vmatpush1.bf16.msra.mxu0 0
        %812 = vmatprep.subr.bf16.mxu0 0
        %813 = vmatpush1.bf16.msra.mxu0 0
        %814 = vmatprep.subr.bf16.mxu0 0
        %815 = vmatpush1.bf16.msra.mxu0 0
        %816 = vmatprep.subr.bf16.mxu0 0
        %817 = vmatpush1.bf16.msra.mxu0 0
        %818 = vmatprep.subr.bf16.mxu0 0
        %819 = vmatpush1.bf16.msra.mxu0 0
        %820 = vmatprep.subr.bf16.mxu0 0
        %821 = vmatpush1.bf16.msra.mxu0 0
        %822 = vmatprep.subr.bf16.mxu0 0
        %823 = vmatpush1.bf16.msra.mxu0 %v806
        %824 = vmatprep.subr.bf16.mxu0 0
        %825 = vmatpush2.bf16.msra.mxu0 0
        %826 = vmatprep.subr.bf16.mxu0 0
        %827 = vmatpush2.bf16.msra.mxu0 0
        %828 = vmatprep.subr.bf16.mxu0 0
        %829 = vmatpush2.bf16.msra.mxu0 0
        %830 = vmatprep.subr.bf16.mxu0 0
        %831 = vmatpush2.bf16.msra.mxu0 0
        %832 = vmatprep.subr.bf16.mxu0 0
        %833 = vmatpush2.bf16.msra.mxu0 0
        %834 = vmatprep.subr.bf16.mxu0 0
        %835 = vmatpush2.bf16.msra.mxu0 0
        %836 = vmatprep.subr.bf16.mxu0 0
        %837 = vmatpush2.bf16.msra.mxu0 0
        %838 = vmatprep.subr.bf16.mxu0 0
        %839 = vmatpush2.bf16.msra.mxu0 0
        %840 = vmatprep.mubr.bf16.mxu0 0
        %841 = vmatmul.mubr.bf16.gmra.mxu0 %v803
        %v842 = vpop.f32.mrf.mxu0
        %v843 = vadd.f32 %v797, %v842
        %v844 = vpop.f32.mrf.mxu0
        %v845 = vpop.f32.mrf.mxu0
        %v846 = vpop.f32.mrf.mxu0
        %847 = vdwg.mxu0
        %848 = vrot.lane.b32.xlu0 %v527, 112
        %v849 = vpop.permute.xlu0 %848
        %850 = vrot.lane.b32.xlu0 %v527, 80
        %v851 = vpop.permute.xlu0 %850
        %v853 = vsel %vm531, %v849, 0
        %v856 = vsel %vm531, %v851, 0
        %858 = vmatprep.subr.bf16.mxu0 0
        %859 = vmatpush1.bf16.xpose.msra.mxu0 0
        %860 = vmatprep.subr.bf16.mxu0 0
        %861 = vmatpush1.bf16.xpose.msra.mxu0 0
        %862 = vmatprep.subr.bf16.mxu0 0
        %863 = vmatpush1.bf16.xpose.msra.mxu0 0
        %864 = vmatprep.subr.bf16.mxu0 0
        %865 = vmatpush1.bf16.xpose.msra.mxu0 0
        %866 = vmatprep.subr.bf16.mxu0 0
        %867 = vmatpush1.bf16.xpose.msra.mxu0 0
        %868 = vmatprep.subr.bf16.mxu0 0
        %869 = vmatpush1.bf16.xpose.msra.mxu0 0
        %870 = vmatprep.subr.bf16.mxu0 0
        %871 = vmatpush1.bf16.xpose.msra.mxu0 0
        %872 = vmatprep.subr.bf16.mxu0 0
        %873 = vmatpush1.bf16.xpose.msra.mxu0 %v856
        %874 = vmatprep.subr.bf16.mxu0 0
        %875 = vmatpush2.bf16.xpose.msra.mxu0 0
        %876 = vmatprep.subr.bf16.mxu0 0
        %877 = vmatpush2.bf16.xpose.msra.mxu0 0
        %878 = vmatprep.subr.bf16.mxu0 0
        %879 = vmatpush2.bf16.xpose.msra.mxu0 0
        %880 = vmatprep.subr.bf16.mxu0 0
        %881 = vmatpush2.bf16.xpose.msra.mxu0 0
        %882 = vmatprep.subr.bf16.mxu0 0
        %883 = vmatpush2.bf16.xpose.msra.mxu0 0
        %884 = vmatprep.subr.bf16.mxu0 0
        %885 = vmatpush2.bf16.xpose.msra.mxu0 0
        %886 = vmatprep.subr.bf16.mxu0 0
        %887 = vmatpush2.bf16.xpose.msra.mxu0 0
        %888 = vmatprep.subr.bf16.mxu0 0
        %889 = vmatpush2.bf16.xpose.msra.mxu0 0
        %890 = vmatprep.mubr.bf16.mxu0 0
        %891 = vmatmul.mubr.bf16.gmra.mxu0 %v853
        %v892 = vpop.f32.mrf.mxu0
        %v893 = vadd.f32 0.0, %v892
        %v894 = vpop.f32.mrf.mxu0
        %v895 = vpop.f32.mrf.mxu0
        %v896 = vpop.f32.mrf.mxu0
        %897 = vdwg.mxu0
        %v898 = vmul.f32 %v893, 0.35355338
        %v899 = vsel %vm531, %v898, -inf
        %900 = vmax.xlane.f32.xlu0 %v899
        %v901 = vpop.xlane.xlu0 %900
        %v902 = vsub.f32 %v898, %v901
        %v903 = vmul.f32 %v902, 1.442695
        %v904 = vpow.pop %v903
        %v905 = vsel %vm531, %v904, 0.0
        %906 = vadd.xlane.f32.xlu0 %v905
        %v907 = vpop.xlane.xlu0 %906
        %v908 = vrcp.pop %v907
        %v909 = vmul.f32 %v904, %v908
        %v910 = vpack.c.bf16 %v909, %v909
        %911 = vrot.lane.b32.xlu0 %v527, 48
        %v912 = vpop.permute.xlu0 %911
        %v914 = vsel %vm531, %v910, 0
        %v917 = vsel %vm596, %v912, 0
        %919 = vmatprep.subr.bf16.mxu0 0
        %920 = vmatpush1.bf16.msra.mxu0 0
        %921 = vmatprep.subr.bf16.mxu0 0
        %922 = vmatpush1.bf16.msra.mxu0 0
        %923 = vmatprep.subr.bf16.mxu0 0
        %924 = vmatpush1.bf16.msra.mxu0 0
        %925 = vmatprep.subr.bf16.mxu0 0
        %926 = vmatpush1.bf16.msra.mxu0 0
        %927 = vmatprep.subr.bf16.mxu0 0
        %928 = vmatpush1.bf16.msra.mxu0 0
        %929 = vmatprep.subr.bf16.mxu0 0
        %930 = vmatpush1.bf16.msra.mxu0 0
        %931 = vmatprep.subr.bf16.mxu0 0
        %932 = vmatpush1.bf16.msra.mxu0 0
        %933 = vmatprep.subr.bf16.mxu0 0
        %934 = vmatpush1.bf16.msra.mxu0 %v917
        %935 = vmatprep.subr.bf16.mxu0 0
        %936 = vmatpush2.bf16.msra.mxu0 0
        %937 = vmatprep.subr.bf16.mxu0 0
        %938 = vmatpush2.bf16.msra.mxu0 0
        %939 = vmatprep.subr.bf16.mxu0 0
        %940 = vmatpush2.bf16.msra.mxu0 0
        %941 = vmatprep.subr.bf16.mxu0 0
        %942 = vmatpush2.bf16.msra.mxu0 0
        %943 = vmatprep.subr.bf16.mxu0 0
        %944 = vmatpush2.bf16.msra.mxu0 0
        %945 = vmatprep.subr.bf16.mxu0 0
        %946 = vmatpush2.bf16.msra.mxu0 0
        %947 = vmatprep.subr.bf16.mxu0 0
        %948 = vmatpush2.bf16.msra.mxu0 0
        %949 = vmatprep.subr.bf16.mxu0 0
        %950 = vmatpush2.bf16.msra.mxu0 0
        %951 = vmatprep.mubr.bf16.mxu0 0
        %952 = vmatmul.mubr.bf16.gmra.mxu0 %v914
        %v953 = vpop.f32.mrf.mxu0
        %v954 = vadd.f32 0.0, %v953
        %v955 = vpop.f32.mrf.mxu0
        %v956 = vpop.f32.mrf.mxu0
        %v957 = vpop.f32.mrf.mxu0
        %958 = vdwg.mxu0
        %v959 = vpack.c.bf16 %v954, %v954
        %s960 = scalar_lea.vmem %s4, 8
        %v961 = vld [vmem:[%s960] sm:$0xf]
        %v963 = vsel %vm531, %v959, 0
        %v966 = vsel %vm596, %v961, 0
        %968 = vmatprep.subr.bf16.mxu0 0
        %969 = vmatpush1.bf16.msra.mxu0 0
        %970 = vmatprep.subr.bf16.mxu0 0
        %971 = vmatpush1.bf16.msra.mxu0 0
        %972 = vmatprep.subr.bf16.mxu0 0
        %973 = vmatpush1.bf16.msra.mxu0 0
        %974 = vmatprep.subr.bf16.mxu0 0
        %975 = vmatpush1.bf16.msra.mxu0 0
        %976 = vmatprep.subr.bf16.mxu0 0
        %977 = vmatpush1.bf16.msra.mxu0 0
        %978 = vmatprep.subr.bf16.mxu0 0
        %979 = vmatpush1.bf16.msra.mxu0 0
        %980 = vmatprep.subr.bf16.mxu0 0
        %981 = vmatpush1.bf16.msra.mxu0 0
        %982 = vmatprep.subr.bf16.mxu0 0
        %983 = vmatpush1.bf16.msra.mxu0 %v966
        %984 = vmatprep.subr.bf16.mxu0 0
        %985 = vmatpush2.bf16.msra.mxu0 0
        %986 = vmatprep.subr.bf16.mxu0 0
        %987 = vmatpush2.bf16.msra.mxu0 0
        %988 = vmatprep.subr.bf16.mxu0 0
        %989 = vmatpush2.bf16.msra.mxu0 0
        %990 = vmatprep.subr.bf16.mxu0 0
        %991 = vmatpush2.bf16.msra.mxu0 0
        %992 = vmatprep.subr.bf16.mxu0 0
        %993 = vmatpush2.bf16.msra.mxu0 0
        %994 = vmatprep.subr.bf16.mxu0 0
        %995 = vmatpush2.bf16.msra.mxu0 0
        %996 = vmatprep.subr.bf16.mxu0 0
        %997 = vmatpush2.bf16.msra.mxu0 0
        %998 = vmatprep.subr.bf16.mxu0 0
        %999 = vmatpush2.bf16.msra.mxu0 0
        %1000 = vmatprep.mubr.bf16.mxu0 0
        %1001 = vmatmul.mubr.bf16.gmra.mxu0 %v963
        %v1002 = vpop.f32.mrf.mxu0
        %v1003 = vadd.f32 0.0, %v1002
        %v1004 = vpop.f32.mrf.mxu0
        %v1005 = vpop.f32.mrf.mxu0
        %v1006 = vpop.f32.mrf.mxu0
        %1007 = vdwg.mxu0
        %v1008 = vadd.f32 %v843, %v1003
        %1009 = vrot.lane.b32.xlu0 %v527, 104
        %v1010 = vpop.permute.xlu0 %1009
        %1011 = vrot.lane.b32.xlu0 %v527, 72
        %v1012 = vpop.permute.xlu0 %1011
        %v1014 = vsel %vm531, %v1010, 0
        %v1017 = vsel %vm531, %v1012, 0
        %1019 = vmatprep.subr.bf16.mxu0 0
        %1020 = vmatpush1.bf16.xpose.msra.mxu0 0
        %1021 = vmatprep.subr.bf16.mxu0 0
        %1022 = vmatpush1.bf16.xpose.msra.mxu0 0
        %1023 = vmatprep.subr.bf16.mxu0 0
        %1024 = vmatpush1.bf16.xpose.msra.mxu0 0
        %1025 = vmatprep.subr.bf16.mxu0 0
        %1026 = vmatpush1.bf16.xpose.msra.mxu0 0
        %1027 = vmatprep.subr.bf16.mxu0 0
        %1028 = vmatpush1.bf16.xpose.msra.mxu0 0
        %1029 = vmatprep.subr.bf16.mxu0 0
        %1030 = vmatpush1.bf16.xpose.msra.mxu0 0
        %1031 = vmatprep.subr.bf16.mxu0 0
        %1032 = vmatpush1.bf16.xpose.msra.mxu0 0
        %1033 = vmatprep.subr.bf16.mxu0 0
        %1034 = vmatpush1.bf16.xpose.msra.mxu0 %v1017
        %1035 = vmatprep.subr.bf16.mxu0 0
        %1036 = vmatpush2.bf16.xpose.msra.mxu0 0
        %1037 = vmatprep.subr.bf16.mxu0 0
        %1038 = vmatpush2.bf16.xpose.msra.mxu0 0
        %1039 = vmatprep.subr.bf16.mxu0 0
        %1040 = vmatpush2.bf16.xpose.msra.mxu0 0
        %1041 = vmatprep.subr.bf16.mxu0 0
        %1042 = vmatpush2.bf16.xpose.msra.mxu0 0
        %1043 = vmatprep.subr.bf16.mxu0 0
        %1044 = vmatpush2.bf16.xpose.msra.mxu0 0
        %1045 = vmatprep.subr.bf16.mxu0 0
        %1046 = vmatpush2.bf16.xpose.msra.mxu0 0
        %1047 = vmatprep.subr.bf16.mxu0 0
        %1048 = vmatpush2.bf16.xpose.msra.mxu0 0
        %1049 = vmatprep.subr.bf16.mxu0 0
        %1050 = vmatpush2.bf16.xpose.msra.mxu0 0
        %1051 = vmatprep.mubr.bf16.mxu0 0
        %1052 = vmatmul.mubr.bf16.gmra.mxu0 %v1014
        %v1053 = vpop.f32.mrf.mxu0
        %v1054 = vadd.f32 0.0, %v1053
        %v1055 = vpop.f32.mrf.mxu0
        %v1056 = vpop.f32.mrf.mxu0
        %v1057 = vpop.f32.mrf.mxu0
        %1058 = vdwg.mxu0
        %v1059 = vmul.f32 %v1054, 0.35355338
        %v1060 = vsel %vm531, %v1059, -inf
        %1061 = vmax.xlane.f32.xlu0 %v1060
        %v1062 = vpop.xlane.xlu0 %1061
        %v1063 = vsub.f32 %v1059, %v1062
        %v1064 = vmul.f32 %v1063, 1.442695
        %v1065 = vpow.pop %v1064
        %v1066 = vsel %vm531, %v1065, 0.0
        %1067 = vadd.xlane.f32.xlu0 %v1066
        %v1068 = vpop.xlane.xlu0 %1067
        %v1069 = vrcp.pop %v1068
        %v1070 = vmul.f32 %v1065, %v1069
        %v1071 = vpack.c.bf16 %v1070, %v1070
        %1072 = vrot.lane.b32.xlu0 %v527, 40
        %v1073 = vpop.permute.xlu0 %1072
        %v1075 = vsel %vm531, %v1071, 0
        %v1078 = vsel %vm596, %v1073, 0
        %1080 = vmatprep.subr.bf16.mxu0 0
        %1081 = vmatpush1.bf16.msra.mxu0 0
        %1082 = vmatprep.subr.bf16.mxu0 0
        %1083 = vmatpush1.bf16.msra.mxu0 0
        %1084 = vmatprep.subr.bf16.mxu0 0
        %1085 = vmatpush1.bf16.msra.mxu0 0
        %1086 = vmatprep.subr.bf16.mxu0 0
        %1087 = vmatpush1.bf16.msra.mxu0 0
        %1088 = vmatprep.subr.bf16.mxu0 0
        %1089 = vmatpush1.bf16.msra.mxu0 0
        %1090 = vmatprep.subr.bf16.mxu0 0
        %1091 = vmatpush1.bf16.msra.mxu0 0
        %1092 = vmatprep.subr.bf16.mxu0 0
        %1093 = vmatpush1.bf16.msra.mxu0 0
        %1094 = vmatprep.subr.bf16.mxu0 0
        %1095 = vmatpush1.bf16.msra.mxu0 %v1078
        %1096 = vmatprep.subr.bf16.mxu0 0
        %1097 = vmatpush2.bf16.msra.mxu0 0
        %1098 = vmatprep.subr.bf16.mxu0 0
        %1099 = vmatpush2.bf16.msra.mxu0 0
        %1100 = vmatprep.subr.bf16.mxu0 0
        %1101 = vmatpush2.bf16.msra.mxu0 0
        %1102 = vmatprep.subr.bf16.mxu0 0
        %1103 = vmatpush2.bf16.msra.mxu0 0
        %1104 = vmatprep.subr.bf16.mxu0 0
        %1105 = vmatpush2.bf16.msra.mxu0 0
        %1106 = vmatprep.subr.bf16.mxu0 0
        %1107 = vmatpush2.bf16.msra.mxu0 0
        %1108 = vmatprep.subr.bf16.mxu0 0
        %1109 = vmatpush2.bf16.msra.mxu0 0
        %1110 = vmatprep.subr.bf16.mxu0 0
        %1111 = vmatpush2.bf16.msra.mxu0 0
        %1112 = vmatprep.mubr.bf16.mxu0 0
        %1113 = vmatmul.mubr.bf16.gmra.mxu0 %v1075
        %v1114 = vpop.f32.mrf.mxu0
        %v1115 = vadd.f32 0.0, %v1114
        %v1116 = vpop.f32.mrf.mxu0
        %v1117 = vpop.f32.mrf.mxu0
        %v1118 = vpop.f32.mrf.mxu0
        %1119 = vdwg.mxu0
        %v1120 = vpack.c.bf16 %v1115, %v1115
        %s1121 = scalar_lea.vmem %s4, 12
        %v1122 = vld [vmem:[%s1121] sm:$0xf]
        %v1124 = vsel %vm531, %v1120, 0
        %v1127 = vsel %vm596, %v1122, 0
        %1129 = vmatprep.subr.bf16.mxu0 0
        %1130 = vmatpush1.bf16.msra.mxu0 0
        %1131 = vmatprep.subr.bf16.mxu0 0
        %1132 = vmatpush1.bf16.msra.mxu0 0
        %1133 = vmatprep.subr.bf16.mxu0 0
        %1134 = vmatpush1.bf16.msra.mxu0 0
        %1135 = vmatprep.subr.bf16.mxu0 0
        %1136 = vmatpush1.bf16.msra.mxu0 0
        %1137 = vmatprep.subr.bf16.mxu0 0
        %1138 = vmatpush1.bf16.msra.mxu0 0
        %1139 = vmatprep.subr.bf16.mxu0 0
        %1140 = vmatpush1.bf16.msra.mxu0 0
        %1141 = vmatprep.subr.bf16.mxu0 0
        %1142 = vmatpush1.bf16.msra.mxu0 0
        %1143 = vmatprep.subr.bf16.mxu0 0
        %1144 = vmatpush1.bf16.msra.mxu0 %v1127
        %1145 = vmatprep.subr.bf16.mxu0 0
        %1146 = vmatpush2.bf16.msra.mxu0 0
        %1147 = vmatprep.subr.bf16.mxu0 0
        %1148 = vmatpush2.bf16.msra.mxu0 0
        %1149 = vmatprep.subr.bf16.mxu0 0
        %1150 = vmatpush2.bf16.msra.mxu0 0
        %1151 = vmatprep.subr.bf16.mxu0 0
        %1152 = vmatpush2.bf16.msra.mxu0 0
        %1153 = vmatprep.subr.bf16.mxu0 0
        %1154 = vmatpush2.bf16.msra.mxu0 0
        %1155 = vmatprep.subr.bf16.mxu0 0
        %1156 = vmatpush2.bf16.msra.mxu0 0
        %1157 = vmatprep.subr.bf16.mxu0 0
        %1158 = vmatpush2.bf16.msra.mxu0 0
        %1159 = vmatprep.subr.bf16.mxu0 0
        %1160 = vmatpush2.bf16.msra.mxu0 0
        %1161 = vmatprep.mubr.bf16.mxu0 0
        %1162 = vmatmul.mubr.bf16.gmra.mxu0 %v1124
        %v1163 = vpop.f32.mrf.mxu0
        %v1164 = vadd.f32 0.0, %v1163
        %v1165 = vpop.f32.mrf.mxu0
        %v1166 = vpop.f32.mrf.mxu0
        %v1167 = vpop.f32.mrf.mxu0
        %1168 = vdwg.mxu0
        %v1169 = vadd.f32 %v1008, %v1164
        %v1170 = vadd.f32 %v410, %v1169
        %v1172 = vlaneseq
        %v1173 = vshrl.u32 %v1172, 7
        %v1174 = vsub.s32 0, %v1173
        %v1175 = vrot.slane %v415, %v1174
        %v1177 = vadd.f32 %v1170, %v1175
        %v1178 = vsel %vm442, %v1177, 0.0
        %1179 = vadd.xlane.f32.xlu0 %v1178
        %v1180 = vpop.xlane.xlu0 %1179
        %v1181 = vmul.f32 %v1180, %v446
        %v1182 = vsub.f32 %v1177, %v1181
        %v1183 = vmul.f32 %v1182, %v1182
        %v1184 = vsel %vm442, %v1183, 0.0
        %1185 = vadd.xlane.f32.xlu0 %v1184
        %v1186 = vpop.xlane.xlu0 %1185
        %v1187 = vmul.f32 %v1186, %v446
        %v1188 = vadd.f32 %v1187, 1e-05
        %v1189 = vrsqrt.pop %v1188
        %v1190 = vmul.f32 %v1182, %v1189
        %v1192 = vlaneseq
        %v1193 = vshrl.u32 %v1192, 7
        %v1194 = vsub.s32 0, %v1193
        %v1195 = vrot.slane %v413, %v1194
        %v1197 = vmul.f32 %v1190, %v1195
        %v1199 = vlaneseq
        %v1200 = vshrl.u32 %v1199, 7
        %v1201 = vsub.s32 0, %v1200
        %v1202 = vrot.slane %v414, %v1201
        %v1204 = vadd.f32 %v1197, %v1202
        %v1205 = vpack.c.bf16 %v1204, %v1204
        %v1207 = vlaneseq
        %v1208 = vshrl.u32 %v1207, 7
        %v1209 = vsub.s32 0, %v1208
        %v1210 = vrot.slane %v416, %v1209
        %v1216 = vunpack.c.l.b16 %v422
        %v1217 = vunpack.c.l.b16 %v423
        %v1218 = vunpack.c.l.b16 %v424
        %v1219 = vunpack.c.l.b16 %v425
        %v1220 = vpack.c.b16 %v1217, %v1216
        %v1221 = vpack.c.b16 %v1219, %v1218
        %v1225 = vsel %vm442, %v1205, 0
        %1227 = vmatprep.subr.bf16.mxu0 0
        %1228 = vmatpush1.bf16.msra.mxu0 0
        %1229 = vmatprep.subr.bf16.mxu0 0
        %1230 = vmatpush1.bf16.msra.mxu0 0
        %1231 = vmatprep.subr.bf16.mxu0 0
        %1232 = vmatpush1.bf16.msra.mxu0 0
        %1233 = vmatprep.subr.bf16.mxu0 0
        %1234 = vmatpush1.bf16.msra.mxu0 0
        %1235 = vmatprep.subr.bf16.mxu0 0
        %1236 = vmatpush1.bf16.msra.mxu0 0
        %1237 = vmatprep.subr.bf16.mxu0 0
        %1238 = vmatpush1.bf16.msra.mxu0 0
        %1239 = vmatprep.subr.bf16.mxu0 0
        %1240 = vmatpush1.bf16.msra.mxu0 %v1221
        %1241 = vmatprep.subr.bf16.mxu0 0
        %1242 = vmatpush1.bf16.msra.mxu0 %v1220
        %1243 = vmatprep.subr.bf16.mxu0 0
        %1244 = vmatpush2.bf16.msra.mxu0 0
        %1245 = vmatprep.subr.bf16.mxu0 0
        %1246 = vmatpush2.bf16.msra.mxu0 0
        %1247 = vmatprep.subr.bf16.mxu0 0
        %1248 = vmatpush2.bf16.msra.mxu0 0
        %1249 = vmatprep.subr.bf16.mxu0 0
        %1250 = vmatpush2.bf16.msra.mxu0 0
        %1251 = vmatprep.subr.bf16.mxu0 0
        %1252 = vmatpush2.bf16.msra.mxu0 0
        %1253 = vmatprep.subr.bf16.mxu0 0
        %1254 = vmatpush2.bf16.msra.mxu0 0
        %1255 = vmatprep.subr.bf16.mxu0 0
        %1256 = vmatpush2.bf16.msra.mxu0 0
        %1257 = vmatprep.subr.bf16.mxu0 0
        %1258 = vmatpush2.bf16.msra.mxu0 0
        %1259 = vmatprep.mubr.bf16.mxu0 0
        %1260 = vmatmul.mubr.bf16.gmra.mxu0 %v1225
        %v1261 = vpop.f32.mrf.mxu0
        %v1262 = vadd.f32 %v1210, %v1261
        %v1263 = vpop.f32.mrf.mxu0
        %v1264 = vpop.f32.mrf.mxu0
        %v1265 = vpop.f32.mrf.mxu0
        %1266 = vdwg.mxu0
        %v1267 = vmul.f32 %v1262, 0.5
        %v1268 = vmul.f32 %v1262, 0.70710677
        %v1269 = verf.f32.pop %v1268
        %v1270 = vadd.f32 %v1269, 1.0
        %v1271 = vmul.f32 %v1267, %v1270
        %v1272 = vpack.c.bf16 %v1271, %v1271
        %v1274 = vlaneseq
        %v1275 = vshrl.u32 %v1274, 7
        %v1276 = vsub.s32 0, %v1275
        %v1277 = vrot.slane %v417, %v1276
        %v1295 = vunpack.c.l.b16 %v426
        %v1296 = vunpack.c.l.b16 %v427
        %v1297 = vunpack.c.l.b16 %v428
        %v1298 = vunpack.c.l.b16 %v429
        %v1299 = vunpack.c.l.b16 %v430
        %v1300 = vunpack.c.l.b16 %v431
        %v1301 = vunpack.c.l.b16 %v432
        %v1302 = vunpack.c.l.b16 %v433
        %v1303 = vunpack.c.l.b16 %v434
        %v1304 = vunpack.c.l.b16 %v435
        %v1305 = vunpack.c.l.b16 %v436
        %v1306 = vunpack.c.l.b16 %v437
        %v1307 = vunpack.c.l.b16 %v438
        %v1308 = vunpack.c.l.b16 %v439
        %v1309 = vunpack.c.l.b16 %v440
        %v1310 = vunpack.c.l.b16 %v441
        %v1311 = vpack.c.b16 %v1296, %v1295
        %v1312 = vpack.c.b16 %v1298, %v1297
        %v1313 = vpack.c.b16 %v1300, %v1299
        %v1314 = vpack.c.b16 %v1302, %v1301
        %v1315 = vpack.c.b16 %v1304, %v1303
        %v1316 = vpack.c.b16 %v1306, %v1305
        %v1317 = vpack.c.b16 %v1308, %v1307
        %v1318 = vpack.c.b16 %v1310, %v1309
        %1327 = vmatprep.subr.bf16.mxu0 0
        %1328 = vmatpush1.bf16.msra.mxu0 %v1318
        %1329 = vmatprep.subr.bf16.mxu0 0
        %1330 = vmatpush1.bf16.msra.mxu0 %v1317
        %1331 = vmatprep.subr.bf16.mxu0 0
        %1332 = vmatpush1.bf16.msra.mxu0 %v1316
        %1333 = vmatprep.subr.bf16.mxu0 0
        %1334 = vmatpush1.bf16.msra.mxu0 %v1315
        %1335 = vmatprep.subr.bf16.mxu0 0
        %1336 = vmatpush1.bf16.msra.mxu0 %v1314
        %1337 = vmatprep.subr.bf16.mxu0 0
        %1338 = vmatpush1.bf16.msra.mxu0 %v1313
        %1339 = vmatprep.subr.bf16.mxu0 0
        %1340 = vmatpush1.bf16.msra.mxu0 %v1312
        %1341 = vmatprep.subr.bf16.mxu0 0
        %1342 = vmatpush1.bf16.msra.mxu0 %v1311
        %1343 = vmatprep.subr.bf16.mxu0 0
        %1344 = vmatpush2.bf16.msra.mxu0 0
        %1345 = vmatprep.subr.bf16.mxu0 0
        %1346 = vmatpush2.bf16.msra.mxu0 0
        %1347 = vmatprep.subr.bf16.mxu0 0
        %1348 = vmatpush2.bf16.msra.mxu0 0
        %1349 = vmatprep.subr.bf16.mxu0 0
        %1350 = vmatpush2.bf16.msra.mxu0 0
        %1351 = vmatprep.subr.bf16.mxu0 0
        %1352 = vmatpush2.bf16.msra.mxu0 0
        %1353 = vmatprep.subr.bf16.mxu0 0
        %1354 = vmatpush2.bf16.msra.mxu0 0
        %1355 = vmatprep.subr.bf16.mxu0 0
        %1356 = vmatpush2.bf16.msra.mxu0 0
        %1357 = vmatprep.subr.bf16.mxu0 0
        %1358 = vmatpush2.bf16.msra.mxu0 0
        %1359 = vmatprep.mubr.bf16.mxu0 0
        %1360 = vmatmul.mubr.bf16.gmra.mxu0 %v1272
        %v1361 = vpop.f32.mrf.mxu0
        %v1362 = vadd.f32 %v1277, %v1361
        %v1363 = vpop.f32.mrf.mxu0
        %v1364 = vpop.f32.mrf.mxu0
        %v1365 = vpop.f32.mrf.mxu0
        %1366 = vdwg.mxu0
        %v1367 = vadd.f32 %v1177, %v1362
        %1368 = vst.msk [vmem:[%s404] sm:$0xff] %vm442, %v1367
        %s1369 = sand.u32 %s291, 1
        %s1370 = scalar_lea.sflag [#allocation3], %s1369
        %s1371 = sand.u32 %s291, 1
        %s1372 = smul.addr %s1371, 8
        %s1373 = scalar_lea.vmem [#allocation2], %s1372
        // Predicated region
        $region69: #{tpu_custom_call.1} parent=67 // pred_check
          %p1374 = pneg %p301
        $region70: #{tpu_custom_call.1} parent=67 // pred_check_branch
          %1376 = sbr.rel (%p1374) target = $region72
        $region71: #{tpu_custom_call.1} parent=67 // pred_region
          %s1378 = ssub.s32 128, 128
          %1379 = vsyncadd %s1370, %s1378
          %s1380 = smul.addr %s26, 128
          %s1381 = scalar_lea.hbm %s12, %s1380
          %s1383 = sshll.u32 %s1373, 4
          %s1384 = int_to_ptr.vmem [resolvable:$true] %s1383
          %1386 = dma.vmem_to_hbm [thread:$0]  %s1384, 128, %s1381, %s1370
        $region72: #{tpu_custom_call.1} parent=67 // pred_fallthru
          _
      $region68: #{tpu_custom_call.1} parent=5 // pred_fallthru
        _
      %p1387 = scmp.le.s32.totalorder 2, %s21
      // Predicated region
      $region73: #{tpu_custom_call.1} parent=5 // pred_check
        %p1388 = pneg %p1387
      $region74: #{tpu_custom_call.1} parent=5 // pred_check_branch
        %1390 = sbr.rel (%p1388) target = $region76
      $region75: #{tpu_custom_call.1} parent=5 // pred_region
        %s1391 = ssub.s32 %s21, 2
        // Predicated region
        $region77: #{tpu_custom_call.1} parent=75 // pred_check
          %p1392 = pneg %p307
        $region78: #{tpu_custom_call.1} parent=75 // pred_check_branch
          %1394 = sbr.rel (%p1392) target = $region80
        $region79: #{tpu_custom_call.1} parent=75 // pred_region
          %s1395 = sand.u32 %s292, 1
          %s1396 = scalar_lea.sflag [#allocation3], %s1395
          %s1397 = sand.u32 %s292, 1
          %s1398 = smul.addr %s1397, 8
          %s1399 = scalar_lea.vmem [#allocation2], %s1398
          %1400 = dma.done %s1396, 128
        $region80: #{tpu_custom_call.1} parent=75 // pred_fallthru
          _
      $region76: #{tpu_custom_call.1} parent=5 // pred_fallthru
        _
    $region6: #{tpu_custom_call.1} parent=1 // loop_footer
      %s25 = sadd.s32 1, %s21
    $region7: #{tpu_custom_call.1} parent=1 // loop_footer_branch
      %20 = sbr.rel target = $region3
    $region8: #{tpu_custom_call.1} parent=1 // loop_exit
      _
    %1401 = vsyncpa [#allocation3], 1
    %s1402 = scalar_lea.sflag [#allocation3], 1
    %1403 = vsyncpa %s1402, 1

</llo_original>
